<compile_context>
chip_gen: v5e
topology: v5e:2x2
jax: 0.10.0
libtpu: 0.0.40
codegen_flags: <defaults>
</compile_context>

<pallas_src>
import functools

import jax
import jax.numpy as jnp
from jax.experimental import pallas as pl
from jax.experimental.pallas import tpu as pltpu


def _encoder_block_kernel(x_ref, w_ref, b_ref, g_ref, bt_ref, m_ref, sel_ref,
                          y_ref, pool_ref, *, W, KH, KW, padding, eps, pack_pool):
    # x_ref:   [N, Cin, Lpad]   flat spatial, zero padded, Lpad % 128 == 0
    # w_ref:   [Cout, KH*KW*Cin], column k = (i*KW + j)*Cin + ci
    # b/g/bt:  [Cout, 1]
    # m_ref:   [KW, HW]  0/1 edge-validity mask per kernel column j (dx = j - padding)
    # sel_ref: [HW, HpWp] 0/1 stride-2 selection matrix (built in wrapper)
    # y_ref:   [N, Cout, HW]
    # pool_ref:[Cout, N*HpWp] if pack_pool else [N*Cout, HpWp]
    N, Cin, Lpad = x_ref.shape
    _, Cout, HW = y_ref.shape
    PADL = padding * W + padding
    f32 = jnp.float32

    # Small params: load once (hoisted out of the tap loop).
    w_all = w_ref[...].astype(f32)          # [Cout, KH*KW*Cin]
    bias = b_ref[...].astype(f32)           # [Cout, 1]
    gamma = g_ref[...].astype(f32)
    beta = bt_ref[...].astype(f32)

    # Load the padded image once; every tap window is an XLU roll + aligned [:HW] prefix slice.
    xfull = x_ref[...].astype(f32)          # [N, Cin, Lpad]

    # ---- Conv2d(KHxKW, 'same' padding): VPU broadcast MACs, 3 independent per-j accumulators ----
    accs = []
    for j in range(KW):
        acc_j = jnp.zeros((N, Cout, HW), f32)
        for i in range(KH):
            off = PADL + (i - padding) * W + (j - padding)      # 0 .. 2*PADL
            shift = (-off) % Lpad                               # roll so index `off` lands at lane 0
            win = pltpu.roll(xfull, shift, 2) if shift else xfull
            xs = win[:, :, :HW]                                 # [N, Cin, HW] (aligned prefix)
            for ci in range(Cin):
                k = (i * KW + j) * Cin + ci
                wk = w_all[:, k:k + 1]                          # [Cout, 1]
                acc_j = acc_j + xs[:, ci:ci + 1, :] * wk[None, :, :]
        if j != padding:                                        # dx != 0 -> hoisted edge mask, once
            mj = m_ref[j:j + 1, :]                              # [1, HW] 0/1
            acc_j = acc_j * mj[None, :, :]
        accs.append(acc_j)
    conv = bias[None, :, :] + accs[0]
    for j in range(1, KW):
        conv = conv + accs[j]

    # ---- BatchNorm2d (training-mode batch mean / biased variance) + ReLU ----
    cnt = f32(N * HW)
    s = jnp.sum(jnp.sum(conv, axis=2, keepdims=True), axis=0, keepdims=True)    # [1, Cout, 1]
    mean = s / cnt
    d = conv - mean
    s2 = jnp.sum(jnp.sum(d * d, axis=2, keepdims=True), axis=0, keepdims=True)
    scale = jax.lax.rsqrt(s2 / cnt + eps) * gamma[None, :, :]                   # fold gamma early
    y = jnp.maximum(d * scale + beta[None, :, :], 0.0)
    y_ref[...] = y.astype(y_ref.dtype)                                          # dense 256-lane stores

    # ---- MaxPool2d(2): two roll+max reductions (XLU) + one stride-2 selection matmul ----
    rowm = jnp.maximum(y, pltpu.roll(y, HW - 1, 2))        # rowm[p] = max(y[p], y[p+1])
    colm = jnp.maximum(rowm, pltpu.roll(rowm, HW - W, 2))  # colm[p] = max over 2x2 window at p
    pooled = jnp.dot(colm.reshape(N * Cout, HW), sel_ref[...],
                     preferred_element_type=f32)           # [N*Cout, HpWp], exact 0/1 gather
    if pack_pool:
        # Lane-densify: concat per-image pooled maps along lanes -> [Cout, N*HpWp] (multiple of 128)
        packed = jnp.concatenate(
            [pooled[n * Cout:(n + 1) * Cout, :] for n in range(N)], axis=-1)
        pool_ref[...] = packed.astype(pool_ref.dtype)       # single unmasked store
    else:
        pool_ref[...] = pooled.astype(pool_ref.dtype)


def encoder_block_forward(x_nchw, w_oihw, bias, gamma, beta, *, padding=1, eps=1e-5):
    """EncoderBlock.forward: returns (x_conv, x_pooled) in NCHW, like the PyTorch module."""
    N, Cin, H, W = x_nchw.shape
    Cout, Cin_w, KH, KW = w_oihw.shape
    assert Cin_w == Cin
    assert KH == 2 * padding + 1 and KW == 2 * padding + 1, "requires 'same' conv"
    assert H % 2 == 0 and W % 2 == 0
    HW = H * W
    Hp, Wp = H // 2, W // 2
    HpWp = Hp * Wp
    PADL = padding * W + padding
    Lpad = ((HW + 2 * PADL + 127) // 128) * 128          # lane-rounded padded length
    pack_pool = (N * HpWp) % 128 == 0
    f32 = jnp.float32

    # Glue (cheap, fuses in XLA): NCHW is already channel-major -> only reshape + flat zero pad.
    x_flat = jnp.pad(x_nchw.astype(f32).reshape(N, Cin, HW),
                     ((0, 0), (0, 0), (PADL, Lpad - HW - PADL)))
    w_k = jnp.transpose(w_oihw.astype(f32), (2, 3, 1, 0)).reshape(KH * KW * Cin, Cout).T
    b_k = bias.astype(f32).reshape(Cout, 1)
    g_k = gamma.astype(f32).reshape(Cout, 1)
    bt_k = beta.astype(f32).reshape(Cout, 1)

    # Hoisted edge-validity masks (one row per kernel column j) -- no in-kernel iota/compare.
    col = jnp.arange(HW, dtype=jnp.int32) % W
    masks = jnp.stack(
        [((col + (j - padding) >= 0) & (col + (j - padding) <= W - 1)).astype(f32)
         for j in range(KW)], axis=0)                                   # [KW, HW]

    # Stride-2 selection matrix for the pool gather, built once host-side (review item).
    q = jnp.arange(HpWp, dtype=jnp.int32)
    base = 2 * (q // Wp) * W + 2 * (q % Wp)                             # top-left flat idx of window q
    sel = (jnp.arange(HW, dtype=jnp.int32)[:, None] == base[None, :]).astype(f32)   # [HW, HpWp]

    pool_shape = (Cout, N * HpWp) if pack_pool else (N * Cout, HpWp)

    vspec = pl.BlockSpec(memory_space=pltpu.MemorySpace.VMEM)
    # Gridless on purpose at this size (everything fits VMEM easily on v5e/v6e/v7x). If N/H/W or
    # channels grow, add a grid over N with dimension_semantics=("parallel",) and a cross-tile BN
    # reduction so batch statistics stay global; on v7x re-derive tile sizes for 64 MiB VMEM and
    # set vmem_limit_bytes explicitly.
    y_flat, p_flat = pl.pallas_call(
        functools.partial(_encoder_block_kernel, W=W, KH=KH, KW=KW,
                          padding=padding, eps=eps, pack_pool=pack_pool),
        out_shape=(
            jax.ShapeDtypeStruct((N, Cout, HW), f32),
            jax.ShapeDtypeStruct(pool_shape, f32),
        ),
        in_specs=[vspec] * 7,
        out_specs=(vspec, vspec),
    )(x_flat, w_k, b_k, g_k, bt_k, masks, sel)

    y = y_flat.reshape(N, Cout, H, W)
    if pack_pool:
        pool = p_flat.reshape(Cout, N, Hp, Wp).transpose(1, 0, 2, 3)    # 4 KB fixup, trivial in XLA
    else:
        pool = p_flat.reshape(N, Cout, Hp, Wp)
    return y, pool
    # TODO(synk): BatchNorm2d running_mean/running_var buffer updates (module state) are not emitted.


def _reference(x, w, b, gamma, beta, padding=1, eps=1e-5):
    y = jax.lax.conv_general_dilated(
        x, w, window_strides=(1, 1),
        padding=((padding, padding), (padding, padding)),
        dimension_numbers=("NCHW", "OIHW", "NCHW"))
    y = y + b[None, :, None, None]
    mean = jnp.mean(y, axis=(0, 2, 3), keepdims=True)
    var = jnp.mean((y - mean) ** 2, axis=(0, 2, 3), keepdims=True)
    y = (y - mean) * jax.lax.rsqrt(var + eps)
    y = y * gamma[None, :, None, None] + beta[None, :, None, None]
    y = jnp.maximum(y, 0.0)
    N, C, H, W = y.shape
    yp = y.reshape(N, C, H // 2, 2, W // 2, 2).max(axis=(3, 5))
    return y, yp


if __name__ == "__main__":
    key = jax.random.PRNGKey(0)
    kx, kw, kb, kg, kbt = jax.random.split(key, 5)
    N, Cin, Cout, H, W = 2, 4, 8, 16, 16

    x = jax.random.normal(kx, (N, Cin, H, W), jnp.float32)
    w = 0.2 * jax.random.normal(kw, (Cout, Cin, 3, 3), jnp.float32)   # Conv2d.weight
    b = 0.1 * jax.random.normal(kb, (Cout,), jnp.float32)             # Conv2d.bias
    gamma = 1.0 + 0.1 * jax.random.normal(kg, (Cout,), jnp.float32)   # BatchNorm2d.weight
    beta = 0.1 * jax.random.normal(kbt, (Cout,), jnp.float32)         # BatchNorm2d.bias

    y, y_pool = jax.jit(encoder_block_forward)(x, w, b, gamma, beta)
    jax.block_until_ready((y, y_pool))

    y_ref, p_ref = _reference(x, w, b, gamma, beta)
    assert y.shape == (N, Cout, H, W)
    assert y_pool.shape == (N, Cout, H // 2, W // 2)
    assert jnp.allclose(y, y_ref, atol=2e-4, rtol=2e-4)
    assert jnp.allclose(y_pool, p_ref, atol=2e-4, rtol=2e-4)

    print("KERNEL_OK")
</pallas_src>

<mosaic_0001>
module attributes {stable_mosaic.version = 11 : i64} {
  func.func @_encoder_block_kernel(%arg0: memref<2x4x384xf32, #tpu.memory_space<vmem>>, %arg1: memref<8x36xf32, #tpu.memory_space<vmem>>, %arg2: memref<8x1xf32, #tpu.memory_space<vmem>>, %arg3: memref<8x1xf32, #tpu.memory_space<vmem>>, %arg4: memref<8x1xf32, #tpu.memory_space<vmem>>, %arg5: memref<3x256xf32, #tpu.memory_space<vmem>>, %arg6: memref<256x64xf32, #tpu.memory_space<vmem>>, %arg7: memref<2x8x256xf32, #tpu.memory_space<vmem>>, %arg8: memref<8x128xf32, #tpu.memory_space<vmem>>) attributes {dimension_semantics = [], scalar_prefetch = 0 : i64, scratch_operands = 0 : i64, tpu.core_type = #tpu.core_type<tc>} {
    %c0 = arith.constant 0 : index
    %c0_0 = arith.constant 0 : index
    %0 = vector.load %arg1[%c0, %c0_0] : memref<8x36xf32, #tpu.memory_space<vmem>>, vector<8x36xf32>
    %c0_1 = arith.constant 0 : index
    %c0_2 = arith.constant 0 : index
    %1 = vector.load %arg2[%c0_1, %c0_2] : memref<8x1xf32, #tpu.memory_space<vmem>>, vector<8x1xf32>
    %c0_3 = arith.constant 0 : index
    %c0_4 = arith.constant 0 : index
    %2 = vector.load %arg3[%c0_3, %c0_4] : memref<8x1xf32, #tpu.memory_space<vmem>>, vector<8x1xf32>
    %c0_5 = arith.constant 0 : index
    %c0_6 = arith.constant 0 : index
    %3 = vector.load %arg4[%c0_5, %c0_6] : memref<8x1xf32, #tpu.memory_space<vmem>>, vector<8x1xf32>
    %c0_7 = arith.constant 0 : index
    %c0_8 = arith.constant 0 : index
    %c0_9 = arith.constant 0 : index
    %4 = vector.load %arg0[%c0_7, %c0_8, %c0_9] : memref<2x4x384xf32, #tpu.memory_space<vmem>>, vector<2x4x384xf32>
    %cst = arith.constant 0.000000e+00 : f32
    %5 = vector.broadcast %cst : f32 to vector<2x8x256xf32>
    %6 = vector.extract_strided_slice %4 {offsets = [0, 0, 0], sizes = [2, 4, 256], strides = [1, 1, 1]} : vector<2x4x384xf32> to vector<2x4x256xf32>
    %7 = vector.extract_strided_slice %0 {offsets = [0, 0], sizes = [8, 1], strides = [1, 1]} : vector<8x36xf32> to vector<8x1xf32>
    %8 = vector.extract_strided_slice %6 {offsets = [0, 0, 0], sizes = [2, 1, 256], strides = [1, 1, 1]} : vector<2x4x256xf32> to vector<2x1x256xf32>
    %9 = vector.shape_cast %7 : vector<8x1xf32> to vector<1x8x1xf32>
    %10 = vector.broadcast %8 : vector<2x1x256xf32> to vector<2x8x256xf32>
    %11 = vector.broadcast %9 : vector<1x8x1xf32> to vector<2x8x256xf32>
    %12 = arith.mulf %10, %11 : vector<2x8x256xf32>
    %13 = arith.addf %5, %12 : vector<2x8x256xf32>
    %14 = vector.extract_strided_slice %0 {offsets = [0, 1], sizes = [8, 1], strides = [1, 1]} : vector<8x36xf32> to vector<8x1xf32>
    %15 = vector.extract_strided_slice %6 {offsets = [0, 1, 0], sizes = [2, 1, 256], strides = [1, 1, 1]} : vector<2x4x256xf32> to vector<2x1x256xf32>
    %16 = vector.shape_cast %14 : vector<8x1xf32> to vector<1x8x1xf32>
    %17 = vector.broadcast %15 : vector<2x1x256xf32> to vector<2x8x256xf32>
    %18 = vector.broadcast %16 : vector<1x8x1xf32> to vector<2x8x256xf32>
    %19 = arith.mulf %17, %18 : vector<2x8x256xf32>
    %20 = arith.addf %13, %19 : vector<2x8x256xf32>
    %21 = vector.extract_strided_slice %0 {offsets = [0, 2], sizes = [8, 1], strides = [1, 1]} : vector<8x36xf32> to vector<8x1xf32>
    %22 = vector.extract_strided_slice %6 {offsets = [0, 2, 0], sizes = [2, 1, 256], strides = [1, 1, 1]} : vector<2x4x256xf32> to vector<2x1x256xf32>
    %23 = vector.shape_cast %21 : vector<8x1xf32> to vector<1x8x1xf32>
    %24 = vector.broadcast %22 : vector<2x1x256xf32> to vector<2x8x256xf32>
    %25 = vector.broadcast %23 : vector<1x8x1xf32> to vector<2x8x256xf32>
    %26 = arith.mulf %24, %25 : vector<2x8x256xf32>
    %27 = arith.addf %20, %26 : vector<2x8x256xf32>
    %28 = vector.extract_strided_slice %0 {offsets = [0, 3], sizes = [8, 1], strides = [1, 1]} : vector<8x36xf32> to vector<8x1xf32>
    %29 = vector.extract_strided_slice %6 {offsets = [0, 3, 0], sizes = [2, 1, 256], strides = [1, 1, 1]} : vector<2x4x256xf32> to vector<2x1x256xf32>
    %30 = vector.shape_cast %28 : vector<8x1xf32> to vector<1x8x1xf32>
    %31 = vector.broadcast %29 : vector<2x1x256xf32> to vector<2x8x256xf32>
    %32 = vector.broadcast %30 : vector<1x8x1xf32> to vector<2x8x256xf32>
    %33 = arith.mulf %31, %32 : vector<2x8x256xf32>
    %34 = arith.addf %27, %33 : vector<2x8x256xf32>
    %c368_i32 = arith.constant 368 : i32
    %35 = tpu.dynamic_rotate %4 by %c368_i32 dim 2 : vector<2x4x384xf32>, i32 -> vector<2x4x384xf32>
    %36 = vector.extract_strided_slice %35 {offsets = [0, 0, 0], sizes = [2, 4, 256], strides = [1, 1, 1]} : vector<2x4x384xf32> to vector<2x4x256xf32>
    %37 = vector.extract_strided_slice %0 {offsets = [0, 12], sizes = [8, 1], strides = [1, 1]} : vector<8x36xf32> to vector<8x1xf32>
    %38 = vector.extract_strided_slice %36 {offsets = [0, 0, 0], sizes = [2, 1, 256], strides = [1, 1, 1]} : vector<2x4x256xf32> to vector<2x1x256xf32>
    %39 = vector.shape_cast %37 : vector<8x1xf32> to vector<1x8x1xf32>
    %40 = vector.broadcast %38 : vector<2x1x256xf32> to vector<2x8x256xf32>
    %41 = vector.broadcast %39 : vector<1x8x1xf32> to vector<2x8x256xf32>
    %42 = arith.mulf %40, %41 : vector<2x8x256xf32>
    %43 = arith.addf %34, %42 : vector<2x8x256xf32>
    %44 = vector.extract_strided_slice %0 {offsets = [0, 13], sizes = [8, 1], strides = [1, 1]} : vector<8x36xf32> to vector<8x1xf32>
    %45 = vector.extract_strided_slice %36 {offsets = [0, 1, 0], sizes = [2, 1, 256], strides = [1, 1, 1]} : vector<2x4x256xf32> to vector<2x1x256xf32>
    %46 = vector.shape_cast %44 : vector<8x1xf32> to vector<1x8x1xf32>
    %47 = vector.broadcast %45 : vector<2x1x256xf32> to vector<2x8x256xf32>
    %48 = vector.broadcast %46 : vector<1x8x1xf32> to vector<2x8x256xf32>
    %49 = arith.mulf %47, %48 : vector<2x8x256xf32>
    %50 = arith.addf %43, %49 : vector<2x8x256xf32>
    %51 = vector.extract_strided_slice %0 {offsets = [0, 14], sizes = [8, 1], strides = [1, 1]} : vector<8x36xf32> to vector<8x1xf32>
    %52 = vector.extract_strided_slice %36 {offsets = [0, 2, 0], sizes = [2, 1, 256], strides = [1, 1, 1]} : vector<2x4x256xf32> to vector<2x1x256xf32>
    %53 = vector.shape_cast %51 : vector<8x1xf32> to vector<1x8x1xf32>
    %54 = vector.broadcast %52 : vector<2x1x256xf32> to vector<2x8x256xf32>
    %55 = vector.broadcast %53 : vector<1x8x1xf32> to vector<2x8x256xf32>
    %56 = arith.mulf %54, %55 : vector<2x8x256xf32>
    %57 = arith.addf %50, %56 : vector<2x8x256xf32>
    %58 = vector.extract_strided_slice %0 {offsets = [0, 15], sizes = [8, 1], strides = [1, 1]} : vector<8x36xf32> to vector<8x1xf32>
    %59 = vector.extract_strided_slice %36 {offsets = [0, 3, 0], sizes = [2, 1, 256], strides = [1, 1, 1]} : vector<2x4x256xf32> to vector<2x1x256xf32>
    %60 = vector.shape_cast %58 : vector<8x1xf32> to vector<1x8x1xf32>
    %61 = vector.broadcast %59 : vector<2x1x256xf32> to vector<2x8x256xf32>
    %62 = vector.broadcast %60 : vector<1x8x1xf32> to vector<2x8x256xf32>
    %63 = arith.mulf %61, %62 : vector<2x8x256xf32>
    %64 = arith.addf %57, %63 : vector<2x8x256xf32>
    %c352_i32 = arith.constant 352 : i32
    %65 = tpu.dynamic_rotate %4 by %c352_i32 dim 2 : vector<2x4x384xf32>, i32 -> vector<2x4x384xf32>
    %66 = vector.extract_strided_slice %65 {offsets = [0, 0, 0], sizes = [2, 4, 256], strides = [1, 1, 1]} : vector<2x4x384xf32> to vector<2x4x256xf32>
    %67 = vector.extract_strided_slice %0 {offsets = [0, 24], sizes = [8, 1], strides = [1, 1]} : vector<8x36xf32> to vector<8x1xf32>
    %68 = vector.extract_strided_slice %66 {offsets = [0, 0, 0], sizes = [2, 1, 256], strides = [1, 1, 1]} : vector<2x4x256xf32> to vector<2x1x256xf32>
    %69 = vector.shape_cast %67 : vector<8x1xf32> to vector<1x8x1xf32>
    %70 = vector.broadcast %68 : vector<2x1x256xf32> to vector<2x8x256xf32>
    %71 = vector.broadcast %69 : vector<1x8x1xf32> to vector<2x8x256xf32>
    %72 = arith.mulf %70, %71 : vector<2x8x256xf32>
    %73 = arith.addf %64, %72 : vector<2x8x256xf32>
    %74 = vector.extract_strided_slice %0 {offsets = [0, 25], sizes = [8, 1], strides = [1, 1]} : vector<8x36xf32> to vector<8x1xf32>
    %75 = vector.extract_strided_slice %66 {offsets = [0, 1, 0], sizes = [2, 1, 256], strides = [1, 1, 1]} : vector<2x4x256xf32> to vector<2x1x256xf32>
    %76 = vector.shape_cast %74 : vector<8x1xf32> to vector<1x8x1xf32>
    %77 = vector.broadcast %75 : vector<2x1x256xf32> to vector<2x8x256xf32>
    %78 = vector.broadcast %76 : vector<1x8x1xf32> to vector<2x8x256xf32>
    %79 = arith.mulf %77, %78 : vector<2x8x256xf32>
    %80 = arith.addf %73, %79 : vector<2x8x256xf32>
    %81 = vector.extract_strided_slice %0 {offsets = [0, 26], sizes = [8, 1], strides = [1, 1]} : vector<8x36xf32> to vector<8x1xf32>
    %82 = vector.extract_strided_slice %66 {offsets = [0, 2, 0], sizes = [2, 1, 256], strides = [1, 1, 1]} : vector<2x4x256xf32> to vector<2x1x256xf32>
    %83 = vector.shape_cast %81 : vector<8x1xf32> to vector<1x8x1xf32>
    %84 = vector.broadcast %82 : vector<2x1x256xf32> to vector<2x8x256xf32>
    %85 = vector.broadcast %83 : vector<1x8x1xf32> to vector<2x8x256xf32>
    %86 = arith.mulf %84, %85 : vector<2x8x256xf32>
    %87 = arith.addf %80, %86 : vector<2x8x256xf32>
    %88 = vector.extract_strided_slice %0 {offsets = [0, 27], sizes = [8, 1], strides = [1, 1]} : vector<8x36xf32> to vector<8x1xf32>
    %89 = vector.extract_strided_slice %66 {offsets = [0, 3, 0], sizes = [2, 1, 256], strides = [1, 1, 1]} : vector<2x4x256xf32> to vector<2x1x256xf32>
    %90 = vector.shape_cast %88 : vector<8x1xf32> to vector<1x8x1xf32>
    %91 = vector.broadcast %89 : vector<2x1x256xf32> to vector<2x8x256xf32>
    %92 = vector.broadcast %90 : vector<1x8x1xf32> to vector<2x8x256xf32>
    %93 = arith.mulf %91, %92 : vector<2x8x256xf32>
    %94 = arith.addf %87, %93 : vector<2x8x256xf32>
    %c0_10 = arith.constant 0 : index
    %c0_11 = arith.constant 0 : index
    %95 = vector.load %arg5[%c0_10, %c0_11] : memref<3x256xf32, #tpu.memory_space<vmem>>, vector<1x256xf32>
    %96 = vector.shape_cast %95 : vector<1x256xf32> to vector<1x1x256xf32>
    %97 = vector.broadcast %96 : vector<1x1x256xf32> to vector<2x8x256xf32>
    %98 = arith.mulf %94, %97 : vector<2x8x256xf32>
    %cst_12 = arith.constant 0.000000e+00 : f32
    %99 = vector.broadcast %cst_12 : f32 to vector<2x8x256xf32>
    %c383_i32 = arith.constant 383 : i32
    %100 = tpu.dynamic_rotate %4 by %c383_i32 dim 2 : vector<2x4x384xf32>, i32 -> vector<2x4x384xf32>
    %101 = vector.extract_strided_slice %100 {offsets = [0, 0, 0], sizes = [2, 4, 256], strides = [1, 1, 1]} : vector<2x4x384xf32> to vector<2x4x256xf32>
    %102 = vector.extract_strided_slice %0 {offsets = [0, 4], sizes = [8, 1], strides = [1, 1]} : vector<8x36xf32> to vector<8x1xf32>
    %103 = vector.extract_strided_slice %101 {offsets = [0, 0, 0], sizes = [2, 1, 256], strides = [1, 1, 1]} : vector<2x4x256xf32> to vector<2x1x256xf32>
    %104 = vector.shape_cast %102 : vector<8x1xf32> to vector<1x8x1xf32>
    %105 = vector.broadcast %103 : vector<2x1x256xf32> to vector<2x8x256xf32>
    %106 = vector.broadcast %104 : vector<1x8x1xf32> to vector<2x8x256xf32>
    %107 = arith.mulf %105, %106 : vector<2x8x256xf32>
    %108 = arith.addf %99, %107 : vector<2x8x256xf32>
    %109 = vector.extract_strided_slice %0 {offsets = [0, 5], sizes = [8, 1], strides = [1, 1]} : vector<8x36xf32> to vector<8x1xf32>
    %110 = vector.extract_strided_slice %101 {offsets = [0, 1, 0], sizes = [2, 1, 256], strides = [1, 1, 1]} : vector<2x4x256xf32> to vector<2x1x256xf32>
    %111 = vector.shape_cast %109 : vector<8x1xf32> to vector<1x8x1xf32>
    %112 = vector.broadcast %110 : vector<2x1x256xf32> to vector<2x8x256xf32>
    %113 = vector.broadcast %111 : vector<1x8x1xf32> to vector<2x8x256xf32>
    %114 = arith.mulf %112, %113 : vector<2x8x256xf32>
    %115 = arith.addf %108, %114 : vector<2x8x256xf32>
    %116 = vector.extract_strided_slice %0 {offsets = [0, 6], sizes = [8, 1], strides = [1, 1]} : vector<8x36xf32> to vector<8x1xf32>
    %117 = vector.extract_strided_slice %101 {offsets = [0, 2, 0], sizes = [2, 1, 256], strides = [1, 1, 1]} : vector<2x4x256xf32> to vector<2x1x256xf32>
    %118 = vector.shape_cast %116 : vector<8x1xf32> to vector<1x8x1xf32>
    %119 = vector.broadcast %117 : vector<2x1x256xf32> to vector<2x8x256xf32>
    %120 = vector.broadcast %118 : vector<1x8x1xf32> to vector<2x8x256xf32>
    %121 = arith.mulf %119, %120 : vector<2x8x256xf32>
    %122 = arith.addf %115, %121 : vector<2x8x256xf32>
    %123 = vector.extract_strided_slice %0 {offsets = [0, 7], sizes = [8, 1], strides = [1, 1]} : vector<8x36xf32> to vector<8x1xf32>
    %124 = vector.extract_strided_slice %101 {offsets = [0, 3, 0], sizes = [2, 1, 256], strides = [1, 1, 1]} : vector<2x4x256xf32> to vector<2x1x256xf32>
    %125 = vector.shape_cast %123 : vector<8x1xf32> to vector<1x8x1xf32>
    %126 = vector.broadcast %124 : vector<2x1x256xf32> to vector<2x8x256xf32>
    %127 = vector.broadcast %125 : vector<1x8x1xf32> to vector<2x8x256xf32>
    %128 = arith.mulf %126, %127 : vector<2x8x256xf32>
    %129 = arith.addf %122, %128 : vector<2x8x256xf32>
    %c367_i32 = arith.constant 367 : i32
    %130 = tpu.dynamic_rotate %4 by %c367_i32 dim 2 : vector<2x4x384xf32>, i32 -> vector<2x4x384xf32>
    %131 = vector.extract_strided_slice %130 {offsets = [0, 0, 0], sizes = [2, 4, 256], strides = [1, 1, 1]} : vector<2x4x384xf32> to vector<2x4x256xf32>
    %132 = vector.extract_strided_slice %0 {offsets = [0, 16], sizes = [8, 1], strides = [1, 1]} : vector<8x36xf32> to vector<8x1xf32>
    %133 = vector.extract_strided_slice %131 {offsets = [0, 0, 0], sizes = [2, 1, 256], strides = [1, 1, 1]} : vector<2x4x256xf32> to vector<2x1x256xf32>
    %134 = vector.shape_cast %132 : vector<8x1xf32> to vector<1x8x1xf32>
    %135 = vector.broadcast %133 : vector<2x1x256xf32> to vector<2x8x256xf32>
    %136 = vector.broadcast %134 : vector<1x8x1xf32> to vector<2x8x256xf32>
    %137 = arith.mulf %135, %136 : vector<2x8x256xf32>
    %138 = arith.addf %129, %137 : vector<2x8x256xf32>
    %139 = vector.extract_strided_slice %0 {offsets = [0, 17], sizes = [8, 1], strides = [1, 1]} : vector<8x36xf32> to vector<8x1xf32>
    %140 = vector.extract_strided_slice %131 {offsets = [0, 1, 0], sizes = [2, 1, 256], strides = [1, 1, 1]} : vector<2x4x256xf32> to vector<2x1x256xf32>
    %141 = vector.shape_cast %139 : vector<8x1xf32> to vector<1x8x1xf32>
    %142 = vector.broadcast %140 : vector<2x1x256xf32> to vector<2x8x256xf32>
    %143 = vector.broadcast %141 : vector<1x8x1xf32> to vector<2x8x256xf32>
    %144 = arith.mulf %142, %143 : vector<2x8x256xf32>
    %145 = arith.addf %138, %144 : vector<2x8x256xf32>
    %146 = vector.extract_strided_slice %0 {offsets = [0, 18], sizes = [8, 1], strides = [1, 1]} : vector<8x36xf32> to vector<8x1xf32>
    %147 = vector.extract_strided_slice %131 {offsets = [0, 2, 0], sizes = [2, 1, 256], strides = [1, 1, 1]} : vector<2x4x256xf32> to vector<2x1x256xf32>
    %148 = vector.shape_cast %146 : vector<8x1xf32> to vector<1x8x1xf32>
    %149 = vector.broadcast %147 : vector<2x1x256xf32> to vector<2x8x256xf32>
    %150 = vector.broadcast %148 : vector<1x8x1xf32> to vector<2x8x256xf32>
    %151 = arith.mulf %149, %150 : vector<2x8x256xf32>
    %152 = arith.addf %145, %151 : vector<2x8x256xf32>
    %153 = vector.extract_strided_slice %0 {offsets = [0, 19], sizes = [8, 1], strides = [1, 1]} : vector<8x36xf32> to vector<8x1xf32>
    %154 = vector.extract_strided_slice %131 {offsets = [0, 3, 0], sizes = [2, 1, 256], strides = [1, 1, 1]} : vector<2x4x256xf32> to vector<2x1x256xf32>
    %155 = vector.shape_cast %153 : vector<8x1xf32> to vector<1x8x1xf32>
    %156 = vector.broadcast %154 : vector<2x1x256xf32> to vector<2x8x256xf32>
    %157 = vector.broadcast %155 : vector<1x8x1xf32> to vector<2x8x256xf32>
    %158 = arith.mulf %156, %157 : vector<2x8x256xf32>
    %159 = arith.addf %152, %158 : vector<2x8x256xf32>
    %c351_i32 = arith.constant 351 : i32
    %160 = tpu.dynamic_rotate %4 by %c351_i32 dim 2 : vector<2x4x384xf32>, i32 -> vector<2x4x384xf32>
    %161 = vector.extract_strided_slice %160 {offsets = [0, 0, 0], sizes = [2, 4, 256], strides = [1, 1, 1]} : vector<2x4x384xf32> to vector<2x4x256xf32>
    %162 = vector.extract_strided_slice %0 {offsets = [0, 28], sizes = [8, 1], strides = [1, 1]} : vector<8x36xf32> to vector<8x1xf32>
    %163 = vector.extract_strided_slice %161 {offsets = [0, 0, 0], sizes = [2, 1, 256], strides = [1, 1, 1]} : vector<2x4x256xf32> to vector<2x1x256xf32>
    %164 = vector.shape_cast %162 : vector<8x1xf32> to vector<1x8x1xf32>
    %165 = vector.broadcast %163 : vector<2x1x256xf32> to vector<2x8x256xf32>
    %166 = vector.broadcast %164 : vector<1x8x1xf32> to vector<2x8x256xf32>
    %167 = arith.mulf %165, %166 : vector<2x8x256xf32>
    %168 = arith.addf %159, %167 : vector<2x8x256xf32>
    %169 = vector.extract_strided_slice %0 {offsets = [0, 29], sizes = [8, 1], strides = [1, 1]} : vector<8x36xf32> to vector<8x1xf32>
    %170 = vector.extract_strided_slice %161 {offsets = [0, 1, 0], sizes = [2, 1, 256], strides = [1, 1, 1]} : vector<2x4x256xf32> to vector<2x1x256xf32>
    %171 = vector.shape_cast %169 : vector<8x1xf32> to vector<1x8x1xf32>
    %172 = vector.broadcast %170 : vector<2x1x256xf32> to vector<2x8x256xf32>
    %173 = vector.broadcast %171 : vector<1x8x1xf32> to vector<2x8x256xf32>
    %174 = arith.mulf %172, %173 : vector<2x8x256xf32>
    %175 = arith.addf %168, %174 : vector<2x8x256xf32>
    %176 = vector.extract_strided_slice %0 {offsets = [0, 30], sizes = [8, 1], strides = [1, 1]} : vector<8x36xf32> to vector<8x1xf32>
    %177 = vector.extract_strided_slice %161 {offsets = [0, 2, 0], sizes = [2, 1, 256], strides = [1, 1, 1]} : vector<2x4x256xf32> to vector<2x1x256xf32>
    %178 = vector.shape_cast %176 : vector<8x1xf32> to vector<1x8x1xf32>
    %179 = vector.broadcast %177 : vector<2x1x256xf32> to vector<2x8x256xf32>
    %180 = vector.broadcast %178 : vector<1x8x1xf32> to vector<2x8x256xf32>
    %181 = arith.mulf %179, %180 : vector<2x8x256xf32>
    %182 = arith.addf %175, %181 : vector<2x8x256xf32>
    %183 = vector.extract_strided_slice %0 {offsets = [0, 31], sizes = [8, 1], strides = [1, 1]} : vector<8x36xf32> to vector<8x1xf32>
    %184 = vector.extract_strided_slice %161 {offsets = [0, 3, 0], sizes = [2, 1, 256], strides = [1, 1, 1]} : vector<2x4x256xf32> to vector<2x1x256xf32>
    %185 = vector.shape_cast %183 : vector<8x1xf32> to vector<1x8x1xf32>
    %186 = vector.broadcast %184 : vector<2x1x256xf32> to vector<2x8x256xf32>
    %187 = vector.broadcast %185 : vector<1x8x1xf32> to vector<2x8x256xf32>
    %188 = arith.mulf %186, %187 : vector<2x8x256xf32>
    %189 = arith.addf %182, %188 : vector<2x8x256xf32>
    %cst_13 = arith.constant 0.000000e+00 : f32
    %190 = vector.broadcast %cst_13 : f32 to vector<2x8x256xf32>
    %c382_i32 = arith.constant 382 : i32
    %191 = tpu.dynamic_rotate %4 by %c382_i32 dim 2 : vector<2x4x384xf32>, i32 -> vector<2x4x384xf32>
    %192 = vector.extract_strided_slice %191 {offsets = [0, 0, 0], sizes = [2, 4, 256], strides = [1, 1, 1]} : vector<2x4x384xf32> to vector<2x4x256xf32>
    %193 = vector.extract_strided_slice %0 {offsets = [0, 8], sizes = [8, 1], strides = [1, 1]} : vector<8x36xf32> to vector<8x1xf32>
    %194 = vector.extract_strided_slice %192 {offsets = [0, 0, 0], sizes = [2, 1, 256], strides = [1, 1, 1]} : vector<2x4x256xf32> to vector<2x1x256xf32>
    %195 = vector.shape_cast %193 : vector<8x1xf32> to vector<1x8x1xf32>
    %196 = vector.broadcast %194 : vector<2x1x256xf32> to vector<2x8x256xf32>
    %197 = vector.broadcast %195 : vector<1x8x1xf32> to vector<2x8x256xf32>
    %198 = arith.mulf %196, %197 : vector<2x8x256xf32>
    %199 = arith.addf %190, %198 : vector<2x8x256xf32>
    %200 = vector.extract_strided_slice %0 {offsets = [0, 9], sizes = [8, 1], strides = [1, 1]} : vector<8x36xf32> to vector<8x1xf32>
    %201 = vector.extract_strided_slice %192 {offsets = [0, 1, 0], sizes = [2, 1, 256], strides = [1, 1, 1]} : vector<2x4x256xf32> to vector<2x1x256xf32>
    %202 = vector.shape_cast %200 : vector<8x1xf32> to vector<1x8x1xf32>
    %203 = vector.broadcast %201 : vector<2x1x256xf32> to vector<2x8x256xf32>
    %204 = vector.broadcast %202 : vector<1x8x1xf32> to vector<2x8x256xf32>
    %205 = arith.mulf %203, %204 : vector<2x8x256xf32>
    %206 = arith.addf %199, %205 : vector<2x8x256xf32>
    %207 = vector.extract_strided_slice %0 {offsets = [0, 10], sizes = [8, 1], strides = [1, 1]} : vector<8x36xf32> to vector<8x1xf32>
    %208 = vector.extract_strided_slice %192 {offsets = [0, 2, 0], sizes = [2, 1, 256], strides = [1, 1, 1]} : vector<2x4x256xf32> to vector<2x1x256xf32>
    %209 = vector.shape_cast %207 : vector<8x1xf32> to vector<1x8x1xf32>
    %210 = vector.broadcast %208 : vector<2x1x256xf32> to vector<2x8x256xf32>
    %211 = vector.broadcast %209 : vector<1x8x1xf32> to vector<2x8x256xf32>
    %212 = arith.mulf %210, %211 : vector<2x8x256xf32>
    %213 = arith.addf %206, %212 : vector<2x8x256xf32>
    %214 = vector.extract_strided_slice %0 {offsets = [0, 11], sizes = [8, 1], strides = [1, 1]} : vector<8x36xf32> to vector<8x1xf32>
    %215 = vector.extract_strided_slice %192 {offsets = [0, 3, 0], sizes = [2, 1, 256], strides = [1, 1, 1]} : vector<2x4x256xf32> to vector<2x1x256xf32>
    %216 = vector.shape_cast %214 : vector<8x1xf32> to vector<1x8x1xf32>
    %217 = vector.broadcast %215 : vector<2x1x256xf32> to vector<2x8x256xf32>
    %218 = vector.broadcast %216 : vector<1x8x1xf32> to vector<2x8x256xf32>
    %219 = arith.mulf %217, %218 : vector<2x8x256xf32>
    %220 = arith.addf %213, %219 : vector<2x8x256xf32>
    %c366_i32 = arith.constant 366 : i32
    %221 = tpu.dynamic_rotate %4 by %c366_i32 dim 2 : vector<2x4x384xf32>, i32 -> vector<2x4x384xf32>
    %222 = vector.extract_strided_slice %221 {offsets = [0, 0, 0], sizes = [2, 4, 256], strides = [1, 1, 1]} : vector<2x4x384xf32> to vector<2x4x256xf32>
    %223 = vector.extract_strided_slice %0 {offsets = [0, 20], sizes = [8, 1], strides = [1, 1]} : vector<8x36xf32> to vector<8x1xf32>
    %224 = vector.extract_strided_slice %222 {offsets = [0, 0, 0], sizes = [2, 1, 256], strides = [1, 1, 1]} : vector<2x4x256xf32> to vector<2x1x256xf32>
    %225 = vector.shape_cast %223 : vector<8x1xf32> to vector<1x8x1xf32>
    %226 = vector.broadcast %224 : vector<2x1x256xf32> to vector<2x8x256xf32>
    %227 = vector.broadcast %225 : vector<1x8x1xf32> to vector<2x8x256xf32>
    %228 = arith.mulf %226, %227 : vector<2x8x256xf32>
    %229 = arith.addf %220, %228 : vector<2x8x256xf32>
    %230 = vector.extract_strided_slice %0 {offsets = [0, 21], sizes = [8, 1], strides = [1, 1]} : vector<8x36xf32> to vector<8x1xf32>
    %231 = vector.extract_strided_slice %222 {offsets = [0, 1, 0], sizes = [2, 1, 256], strides = [1, 1, 1]} : vector<2x4x256xf32> to vector<2x1x256xf32>
    %232 = vector.shape_cast %230 : vector<8x1xf32> to vector<1x8x1xf32>
    %233 = vector.broadcast %231 : vector<2x1x256xf32> to vector<2x8x256xf32>
    %234 = vector.broadcast %232 : vector<1x8x1xf32> to vector<2x8x256xf32>
    %235 = arith.mulf %233, %234 : vector<2x8x256xf32>
    %236 = arith.addf %229, %235 : vector<2x8x256xf32>
    %237 = vector.extract_strided_slice %0 {offsets = [0, 22], sizes = [8, 1], strides = [1, 1]} : vector<8x36xf32> to vector<8x1xf32>
    %238 = vector.extract_strided_slice %222 {offsets = [0, 2, 0], sizes = [2, 1, 256], strides = [1, 1, 1]} : vector<2x4x256xf32> to vector<2x1x256xf32>
    %239 = vector.shape_cast %237 : vector<8x1xf32> to vector<1x8x1xf32>
    %240 = vector.broadcast %238 : vector<2x1x256xf32> to vector<2x8x256xf32>
    %241 = vector.broadcast %239 : vector<1x8x1xf32> to vector<2x8x256xf32>
    %242 = arith.mulf %240, %241 : vector<2x8x256xf32>
    %243 = arith.addf %236, %242 : vector<2x8x256xf32>
    %244 = vector.extract_strided_slice %0 {offsets = [0, 23], sizes = [8, 1], strides = [1, 1]} : vector<8x36xf32> to vector<8x1xf32>
    %245 = vector.extract_strided_slice %222 {offsets = [0, 3, 0], sizes = [2, 1, 256], strides = [1, 1, 1]} : vector<2x4x256xf32> to vector<2x1x256xf32>
    %246 = vector.shape_cast %244 : vector<8x1xf32> to vector<1x8x1xf32>
    %247 = vector.broadcast %245 : vector<2x1x256xf32> to vector<2x8x256xf32>
    %248 = vector.broadcast %246 : vector<1x8x1xf32> to vector<2x8x256xf32>
    %249 = arith.mulf %247, %248 : vector<2x8x256xf32>
    %250 = arith.addf %243, %249 : vector<2x8x256xf32>
    %c350_i32 = arith.constant 350 : i32
    %251 = tpu.dynamic_rotate %4 by %c350_i32 dim 2 : vector<2x4x384xf32>, i32 -> vector<2x4x384xf32>
    %252 = vector.extract_strided_slice %251 {offsets = [0, 0, 0], sizes = [2, 4, 256], strides = [1, 1, 1]} : vector<2x4x384xf32> to vector<2x4x256xf32>
    %253 = vector.extract_strided_slice %0 {offsets = [0, 32], sizes = [8, 1], strides = [1, 1]} : vector<8x36xf32> to vector<8x1xf32>
    %254 = vector.extract_strided_slice %252 {offsets = [0, 0, 0], sizes = [2, 1, 256], strides = [1, 1, 1]} : vector<2x4x256xf32> to vector<2x1x256xf32>
    %255 = vector.shape_cast %253 : vector<8x1xf32> to vector<1x8x1xf32>
    %256 = vector.broadcast %254 : vector<2x1x256xf32> to vector<2x8x256xf32>
    %257 = vector.broadcast %255 : vector<1x8x1xf32> to vector<2x8x256xf32>
    %258 = arith.mulf %256, %257 : vector<2x8x256xf32>
    %259 = arith.addf %250, %258 : vector<2x8x256xf32>
    %260 = vector.extract_strided_slice %0 {offsets = [0, 33], sizes = [8, 1], strides = [1, 1]} : vector<8x36xf32> to vector<8x1xf32>
    %261 = vector.extract_strided_slice %252 {offsets = [0, 1, 0], sizes = [2, 1, 256], strides = [1, 1, 1]} : vector<2x4x256xf32> to vector<2x1x256xf32>
    %262 = vector.shape_cast %260 : vector<8x1xf32> to vector<1x8x1xf32>
    %263 = vector.broadcast %261 : vector<2x1x256xf32> to vector<2x8x256xf32>
    %264 = vector.broadcast %262 : vector<1x8x1xf32> to vector<2x8x256xf32>
    %265 = arith.mulf %263, %264 : vector<2x8x256xf32>
    %266 = arith.addf %259, %265 : vector<2x8x256xf32>
    %267 = vector.extract_strided_slice %0 {offsets = [0, 34], sizes = [8, 1], strides = [1, 1]} : vector<8x36xf32> to vector<8x1xf32>
    %268 = vector.extract_strided_slice %252 {offsets = [0, 2, 0], sizes = [2, 1, 256], strides = [1, 1, 1]} : vector<2x4x256xf32> to vector<2x1x256xf32>
    %269 = vector.shape_cast %267 : vector<8x1xf32> to vector<1x8x1xf32>
    %270 = vector.broadcast %268 : vector<2x1x256xf32> to vector<2x8x256xf32>
    %271 = vector.broadcast %269 : vector<1x8x1xf32> to vector<2x8x256xf32>
    %272 = arith.mulf %270, %271 : vector<2x8x256xf32>
    %273 = arith.addf %266, %272 : vector<2x8x256xf32>
    %274 = vector.extract_strided_slice %0 {offsets = [0, 35], sizes = [8, 1], strides = [1, 1]} : vector<8x36xf32> to vector<8x1xf32>
    %275 = vector.extract_strided_slice %252 {offsets = [0, 3, 0], sizes = [2, 1, 256], strides = [1, 1, 1]} : vector<2x4x256xf32> to vector<2x1x256xf32>
    %276 = vector.shape_cast %274 : vector<8x1xf32> to vector<1x8x1xf32>
    %277 = vector.broadcast %275 : vector<2x1x256xf32> to vector<2x8x256xf32>
    %278 = vector.broadcast %276 : vector<1x8x1xf32> to vector<2x8x256xf32>
    %279 = arith.mulf %277, %278 : vector<2x8x256xf32>
    %280 = arith.addf %273, %279 : vector<2x8x256xf32>
    %c2 = arith.constant 2 : index
    %c0_14 = arith.constant 0 : index
    %281 = vector.load %arg5[%c2, %c0_14] : memref<3x256xf32, #tpu.memory_space<vmem>>, vector<1x256xf32>
    %282 = vector.shape_cast %281 : vector<1x256xf32> to vector<1x1x256xf32>
    %283 = vector.broadcast %282 : vector<1x1x256xf32> to vector<2x8x256xf32>
    %284 = arith.mulf %280, %283 : vector<2x8x256xf32>
    %285 = vector.shape_cast %1 : vector<8x1xf32> to vector<1x8x1xf32>
    %286 = vector.broadcast %285 : vector<1x8x1xf32> to vector<2x8x256xf32>
    %287 = arith.addf %286, %98 : vector<2x8x256xf32>
    %288 = arith.addf %287, %189 : vector<2x8x256xf32>
    %289 = arith.addf %288, %284 : vector<2x8x256xf32>
    %cst_15 = arith.constant dense<0.000000e+00> : vector<2x8xf32>
    %290 = vector.multi_reduction <add>, %289, %cst_15 [2] : vector<2x8x256xf32> to vector<2x8xf32>
    %291 = vector.shape_cast %290 : vector<2x8xf32> to vector<2x8x1xf32>
    %cst_16 = arith.constant dense<0.000000e+00> : vector<8x1xf32>
    %292 = vector.multi_reduction <add>, %291, %cst_16 [0] : vector<2x8x1xf32> to vector<8x1xf32>
    %293 = vector.shape_cast %292 : vector<8x1xf32> to vector<1x8x1xf32>
    %cst_17 = arith.constant 5.120000e+02 : f32
    %294 = vector.broadcast %cst_17 : f32 to vector<1x8x1xf32>
    %295 = arith.divf %293, %294 : vector<1x8x1xf32>
    %296 = vector.broadcast %295 : vector<1x8x1xf32> to vector<2x8x256xf32>
    %297 = arith.subf %289, %296 : vector<2x8x256xf32>
    %298 = arith.mulf %297, %297 : vector<2x8x256xf32>
    %cst_18 = arith.constant dense<0.000000e+00> : vector<2x8xf32>
    %299 = vector.multi_reduction <add>, %298, %cst_18 [2] : vector<2x8x256xf32> to vector<2x8xf32>
    %300 = vector.shape_cast %299 : vector<2x8xf32> to vector<2x8x1xf32>
    %cst_19 = arith.constant dense<0.000000e+00> : vector<8x1xf32>
    %301 = vector.multi_reduction <add>, %300, %cst_19 [0] : vector<2x8x1xf32> to vector<8x1xf32>
    %302 = vector.shape_cast %301 : vector<8x1xf32> to vector<1x8x1xf32>
    %cst_20 = arith.constant 5.120000e+02 : f32
    %303 = vector.broadcast %cst_20 : f32 to vector<1x8x1xf32>
    %304 = arith.divf %302, %303 : vector<1x8x1xf32>
    %cst_21 = arith.constant 9.99999974E-6 : f32
    %305 = vector.broadcast %cst_21 : f32 to vector<1x8x1xf32>
    %306 = arith.addf %304, %305 : vector<1x8x1xf32>
    %307 = math.rsqrt %306 : vector<1x8x1xf32>
    %308 = vector.shape_cast %2 : vector<8x1xf32> to vector<1x8x1xf32>
    %309 = arith.mulf %307, %308 : vector<1x8x1xf32>
    %310 = vector.broadcast %309 : vector<1x8x1xf32> to vector<2x8x256xf32>
    %311 = arith.mulf %297, %310 : vector<2x8x256xf32>
    %312 = vector.shape_cast %3 : vector<8x1xf32> to vector<1x8x1xf32>
    %313 = vector.broadcast %312 : vector<1x8x1xf32> to vector<2x8x256xf32>
    %314 = arith.addf %311, %313 : vector<2x8x256xf32>
    %cst_22 = arith.constant 0.000000e+00 : f32
    %315 = vector.broadcast %cst_22 : f32 to vector<2x8x256xf32>
    %316 = arith.maximumf %314, %315 : vector<2x8x256xf32>
    %c0_23 = arith.constant 0 : index
    %c0_24 = arith.constant 0 : index
    %c0_25 = arith.constant 0 : index
    %317 = vector.load %arg7[%c0_23, %c0_24, %c0_25] : memref<2x8x256xf32, #tpu.memory_space<vmem>>, vector<2x8x256xf32>
    tpu.vector_store %arg7[%c0_23, %c0_24, %c0_25], %316 {strides = array<i32>} : memref<2x8x256xf32, #tpu.memory_space<vmem>>, vector<2x8x256xf32>,
    %c255_i32 = arith.constant 255 : i32
    %318 = tpu.dynamic_rotate %316 by %c255_i32 dim 2 : vector<2x8x256xf32>, i32 -> vector<2x8x256xf32>
    %319 = arith.maximumf %316, %318 : vector<2x8x256xf32>
    %c240_i32 = arith.constant 240 : i32
    %320 = tpu.dynamic_rotate %319 by %c240_i32 dim 2 : vector<2x8x256xf32>, i32 -> vector<2x8x256xf32>
    %321 = arith.maximumf %319, %320 : vector<2x8x256xf32>
    %322 = vector.shape_cast %321 : vector<2x8x256xf32> to vector<16x256xf32>
    %c0_26 = arith.constant 0 : index
    %c0_27 = arith.constant 0 : index
    %323 = vector.load %arg6[%c0_26, %c0_27] : memref<256x64xf32, #tpu.memory_space<vmem>>, vector<256x64xf32>
    %cst_28 = arith.constant dense<0.000000e+00> : vector<16x64xf32>
    %324 = tpu.matmul %322, %323, %cst_28 {dimension_numbers = #tpu.dot_dimension_numbers<[1], [0], [0], [1], [0, 0, 1, 1], [], []>} : vector<16x256xf32>, vector<256x64xf32>, vector<16x64xf32> -> vector<16x64xf32>
    %325 = vector.extract_strided_slice %324 {offsets = [0, 0], sizes = [8, 64], strides = [1, 1]} : vector<16x64xf32> to vector<8x64xf32>
    %326 = vector.extract_strided_slice %324 {offsets = [8, 0], sizes = [8, 64], strides = [1, 1]} : vector<16x64xf32> to vector<8x64xf32>
    %327 = tpu.concatenate %325, %326 in 1 : vector<8x64xf32>, vector<8x64xf32> -> vector<8x128xf32>
    %c0_29 = arith.constant 0 : index
    %c0_30 = arith.constant 0 : index
    %328 = vector.load %arg8[%c0_29, %c0_30] : memref<8x128xf32, #tpu.memory_space<vmem>>, vector<8x128xf32>
    tpu.vector_store %arg8[%c0_29, %c0_30], %327 {strides = array<i32>} : memref<8x128xf32, #tpu.memory_space<vmem>>, vector<8x128xf32>,
    return
  }
}

</mosaic_0001>

<llo_original>
// kernel: encoder_block_forward.1
$region0: #{encoder_block_forward.1}
  #allocation0 [shape = 'u32[]', space=smem, size = 0x4, offset = 0x4, fixed_abs, tag = 'smem constant byte address 0x4 - core index']
  #allocation1 [shape = 'u32[72,128]{1,0:T(1,128)}', space=vmem, size = 0x9000, scoped, tag = 'internal scratch']
  %s0 = inlined_call_operand.vmem [shape: f32[2,4,384], index: 0, kind: input, shape index: {}]
  %s1 = inlined_call_operand.vmem [shape: f32[8,36], index: 1, kind: input, shape index: {}]
  %s2 = inlined_call_operand.vmem [shape: f32[8,1], index: 2, kind: input, shape index: {}]
  %s3 = inlined_call_operand.vmem [shape: f32[8,1], index: 3, kind: input, shape index: {}]
  %s4 = inlined_call_operand.vmem [shape: f32[8,1], index: 4, kind: input, shape index: {}]
  %s5 = inlined_call_operand.vmem [shape: f32[3,256], index: 5, kind: input, shape index: {}]
  %s6 = inlined_call_operand.vmem [shape: f32[256,64], index: 6, kind: input, shape index: {}]
  %s7 = inlined_call_operand.vmem [shape: f32[2,8,256], index: 7, kind: output, shape index: {0}]
  %s8 = inlined_call_operand.vmem [shape: f32[8,128], index: 8, kind: output, shape index: {1}]
  %9 = xla_tuple %s7, %s8
  %s10 = sld [smem:[#allocation0]]
  $region46: #{encoder_block_forward.1} parent=0
    _
  %s12 = ssub.s32 1, %s10
  %s13 = scalar_select 0, %s12, %s10
  // Predicated region
  $region2: #{encoder_block_forward.1} parent=0 // pred_check
    _
  $region3: #{encoder_block_forward.1} parent=0 // pred_check_branch
    %15 = sbr.rel (0) target = $region5
  $region4: #{encoder_block_forward.1} parent=0 // pred_region
    _
  $region5: #{encoder_block_forward.1} parent=0 // pred_fallthru
    _
  // Predicated region
  $region6: #{encoder_block_forward.1} parent=0 // pred_check
    _
  $region7: #{encoder_block_forward.1} parent=0 // pred_check_branch
    %17 = sbr.rel (0) target = $region9
  $region8: #{encoder_block_forward.1} parent=0 // pred_region
    _
  $region9: #{encoder_block_forward.1} parent=0 // pred_fallthru
    _
  // Predicated region
  $region10: #{encoder_block_forward.1} parent=0 // pred_check
    _
  $region11: #{encoder_block_forward.1} parent=0 // pred_check_branch
    %19 = sbr.rel (0) target = $region13
  $region12: #{encoder_block_forward.1} parent=0 // pred_region
    _
  $region13: #{encoder_block_forward.1} parent=0 // pred_fallthru
    _
  // Predicated region
  $region14: #{encoder_block_forward.1} parent=0 // pred_check
    _
  $region15: #{encoder_block_forward.1} parent=0 // pred_check_branch
    %21 = sbr.rel (0) target = $region17
  $region16: #{encoder_block_forward.1} parent=0 // pred_region
    _
  $region17: #{encoder_block_forward.1} parent=0 // pred_fallthru
    _
  // Predicated region
  $region18: #{encoder_block_forward.1} parent=0 // pred_check
    _
  $region19: #{encoder_block_forward.1} parent=0 // pred_check_branch
    %23 = sbr.rel (0) target = $region21
  $region20: #{encoder_block_forward.1} parent=0 // pred_region
    _
  $region21: #{encoder_block_forward.1} parent=0 // pred_fallthru
    _
  // Predicated region
  $region22: #{encoder_block_forward.1} parent=0 // pred_check
    _
  $region23: #{encoder_block_forward.1} parent=0 // pred_check_branch
    %25 = sbr.rel (0) target = $region25
  $region24: #{encoder_block_forward.1} parent=0 // pred_region
    _
  $region25: #{encoder_block_forward.1} parent=0 // pred_fallthru
    _
  // Predicated region
  $region26: #{encoder_block_forward.1} parent=0 // pred_check
    _
  $region27: #{encoder_block_forward.1} parent=0 // pred_check_branch
    %27 = sbr.rel (0) target = $region29
  $region28: #{encoder_block_forward.1} parent=0 // pred_region
    _
  $region29: #{encoder_block_forward.1} parent=0 // pred_fallthru
    _
  %v28 = vld [vmem:[%s1] sm:$0xff]
  %v29 = vld [vmem:[%s2] sm:$0xff]
  %v30 = vld [vmem:[%s3] sm:$0xff]
  %v31 = vld [vmem:[%s4] sm:$0xff]
  %v32 = vld [vmem:[%s0] sm:$0xff]
  %v33 = vld [vmem:[%s0 + $0x8] sm:$0xf]
  %v34 = vld [vmem:[%s0 + $0xc] sm:$0xff]
  %v35 = vld [vmem:[%s0 + $0x14] sm:$0xf]
  %v38 = vperm.slane %v32, 0
  %v39 = vperm.slane %v32, 4
  %v40 = vperm.slane %v34, 0
  %v41 = vperm.slane %v34, 4
  %v46 = vperm.slane %v38, 0
  %v47 = vperm.slane %v39, 0
  %v48 = vperm.slane %v40, 0
  %v49 = vperm.slane %v41, 0
  %51 = vset.pattern.permute.xlu0 0
  %52 = vperm.xlu0 %51, %v28
  %v53 = vpop.permute.xlu0 %52
  %v55 = vmul.f32 %v46, %v53
  %v56 = vmul.f32 %v47, %v53
  %v57 = vmul.f32 %v48, %v53
  %v58 = vmul.f32 %v49, %v53
  %v59 = vadd.f32 %v55, 0.0
  %v60 = vadd.f32 %v56, 0.0
  %v61 = vadd.f32 %v57, 0.0
  %v62 = vadd.f32 %v58, 0.0
  %v63 = vperm.slane %v32, 1
  %v64 = vperm.slane %v32, 5
  %v65 = vperm.slane %v34, 1
  %v66 = vperm.slane %v34, 5
  %v71 = vperm.slane %v63, 1
  %v72 = vperm.slane %v64, 1
  %v73 = vperm.slane %v65, 1
  %v74 = vperm.slane %v66, 1
  %75 = vset.pattern.permute.xlu0 1
  %76 = vperm.xlu0 %75, %v28
  %v77 = vpop.permute.xlu0 %76
  %v79 = vmul.f32 %v71, %v77
  %v80 = vmul.f32 %v72, %v77
  %v81 = vmul.f32 %v73, %v77
  %v82 = vmul.f32 %v74, %v77
  %v83 = vadd.f32 %v59, %v79
  %v84 = vadd.f32 %v60, %v80
  %v85 = vadd.f32 %v61, %v81
  %v86 = vadd.f32 %v62, %v82
  %v87 = vperm.slane %v32, 2
  %v88 = vperm.slane %v32, 6
  %v89 = vperm.slane %v34, 2
  %v90 = vperm.slane %v34, 6
  %v95 = vperm.slane %v87, 2
  %v96 = vperm.slane %v88, 2
  %v97 = vperm.slane %v89, 2
  %v98 = vperm.slane %v90, 2
  %99 = vset.pattern.permute.xlu0 2
  %100 = vperm.xlu0 %99, %v28
  %v101 = vpop.permute.xlu0 %100
  %v103 = vmul.f32 %v95, %v101
  %v104 = vmul.f32 %v96, %v101
  %v105 = vmul.f32 %v97, %v101
  %v106 = vmul.f32 %v98, %v101
  %v107 = vadd.f32 %v83, %v103
  %v108 = vadd.f32 %v84, %v104
  %v109 = vadd.f32 %v85, %v105
  %v110 = vadd.f32 %v86, %v106
  %v111 = vperm.slane %v32, 3
  %v112 = vperm.slane %v32, 7
  %v113 = vperm.slane %v34, 3
  %v114 = vperm.slane %v34, 7
  %v119 = vperm.slane %v111, 3
  %v120 = vperm.slane %v112, 3
  %v121 = vperm.slane %v113, 3
  %v122 = vperm.slane %v114, 3
  %123 = vset.pattern.permute.xlu0 3
  %124 = vperm.xlu0 %123, %v28
  %v125 = vpop.permute.xlu0 %124
  %v127 = vmul.f32 %v119, %v125
  %v128 = vmul.f32 %v120, %v125
  %v129 = vmul.f32 %v121, %v125
  %v130 = vmul.f32 %v122, %v125
  %v131 = vadd.f32 %v107, %v127
  %v132 = vadd.f32 %v108, %v128
  %v133 = vadd.f32 %v109, %v129
  %v134 = vadd.f32 %v110, %v130
  %137 = vst [vmem:[#allocation1] ss:$2 sm:$0xff] %v32
  %s138 = scalar_lea.vmem [#allocation1], 16
  %139 = vst [vmem:[%s138] ss:$2 sm:$0xff] %v33
  %v140 = vld.sshfl [vmem:[#allocation1] sm:$0xff pattern:$0x75316420]
  %v141 = vld.sshfl [vmem:[#allocation1 + $0x8] sm:$0xff pattern:$0x75316420]
  %v142 = vld.sshfl [vmem:[#allocation1 + $0x10] sm:$0xff pattern:$0x75316420]
  %s143 = scalar_lea.vmem [#allocation1], 32
  %144 = vst [vmem:[%s143] ss:$2 sm:$0xff] %v34
  %s145 = scalar_lea.vmem [#allocation1], 48
  %146 = vst [vmem:[%s145] ss:$2 sm:$0xff] %v35
  %v147 = vld.sshfl [vmem:[#allocation1 + $0x20] sm:$0xff pattern:$0x75316420]
  %v148 = vld.sshfl [vmem:[#allocation1 + $0x28] sm:$0xff pattern:$0x75316420]
  %v149 = vld.sshfl [vmem:[#allocation1 + $0x30] sm:$0xff pattern:$0x75316420]
  %156 = vrot.lane.b32.xlu0 %v140, 112
  %v157 = vpop.permute.xlu0 %156
  %158 = vrot.lane.b32.xlu0 %v147, 112
  %v159 = vpop.permute.xlu0 %158
  %160 = vrot.lane.b32.xlu0 %v141, 112
  %v161 = vpop.permute.xlu0 %160
  %162 = vrot.lane.b32.xlu0 %v148, 112
  %v163 = vpop.permute.xlu0 %162
  %164 = vrot.lane.b32.xlu0 %v142, 112
  %v165 = vpop.permute.xlu0 %164
  %166 = vrot.lane.b32.xlu0 %v149, 112
  %v167 = vpop.permute.xlu0 %166
  %v168 = vlaneseq
  %v169 = vand.u32 %v168, 127
  %vm170 = vcmp.lt.s32.totalorder %v169, 112
  %v171 = vsel %vm170, %v161, %v165
  %v172 = vsel %vm170, %v163, %v167
  %v173 = vsel %vm170, %v157, %v161
  %v174 = vsel %vm170, %v159, %v163
  %v175 = vperm.slane %v173, 0
  %v176 = vperm.slane %v171, 0
  %v177 = vperm.slane %v174, 0
  %v178 = vperm.slane %v172, 0
  %179 = vset.pattern.permute.xlu0 12
  %180 = vperm.xlu0 %179, %v28
  %v181 = vpop.permute.xlu0 %180
  %v183 = vmul.f32 %v175, %v181
  %v184 = vmul.f32 %v176, %v181
  %v185 = vmul.f32 %v177, %v181
  %v186 = vmul.f32 %v178, %v181
  %v187 = vadd.f32 %v131, %v183
  %v188 = vadd.f32 %v132, %v184
  %v189 = vadd.f32 %v133, %v185
  %v190 = vadd.f32 %v134, %v186
  %v191 = vperm.slane %v173, 1
  %v192 = vperm.slane %v171, 1
  %v193 = vperm.slane %v174, 1
  %v194 = vperm.slane %v172, 1
  %195 = vset.pattern.permute.xlu0 13
  %196 = vperm.xlu0 %195, %v28
  %v197 = vpop.permute.xlu0 %196
  %v199 = vmul.f32 %v191, %v197
  %v200 = vmul.f32 %v192, %v197
  %v201 = vmul.f32 %v193, %v197
  %v202 = vmul.f32 %v194, %v197
  %v203 = vadd.f32 %v187, %v199
  %v204 = vadd.f32 %v188, %v200
  %v205 = vadd.f32 %v189, %v201
  %v206 = vadd.f32 %v190, %v202
  %v207 = vperm.slane %v173, 2
  %v208 = vperm.slane %v171, 2
  %v209 = vperm.slane %v174, 2
  %v210 = vperm.slane %v172, 2
  %211 = vset.pattern.permute.xlu0 14
  %212 = vperm.xlu0 %211, %v28
  %v213 = vpop.permute.xlu0 %212
  %v215 = vmul.f32 %v207, %v213
  %v216 = vmul.f32 %v208, %v213
  %v217 = vmul.f32 %v209, %v213
  %v218 = vmul.f32 %v210, %v213
  %v219 = vadd.f32 %v203, %v215
  %v220 = vadd.f32 %v204, %v216
  %v221 = vadd.f32 %v205, %v217
  %v222 = vadd.f32 %v206, %v218
  %v223 = vperm.slane %v173, 3
  %v224 = vperm.slane %v171, 3
  %v225 = vperm.slane %v174, 3
  %v226 = vperm.slane %v172, 3
  %227 = vset.pattern.permute.xlu0 15
  %228 = vperm.xlu0 %227, %v28
  %v229 = vpop.permute.xlu0 %228
  %v231 = vmul.f32 %v223, %v229
  %v232 = vmul.f32 %v224, %v229
  %v233 = vmul.f32 %v225, %v229
  %v234 = vmul.f32 %v226, %v229
  %v235 = vadd.f32 %v219, %v231
  %v236 = vadd.f32 %v220, %v232
  %v237 = vadd.f32 %v221, %v233
  %v238 = vadd.f32 %v222, %v234
  %239 = vst [vmem:[#allocation1] ss:$2 sm:$0xff] %v32
  %s240 = scalar_lea.vmem [#allocation1], 16
  %241 = vst [vmem:[%s240] ss:$2 sm:$0xff] %v33
  %v242 = vld.sshfl [vmem:[#allocation1] sm:$0xff pattern:$0x75316420]
  %v243 = vld.sshfl [vmem:[#allocation1 + $0x8] sm:$0xff pattern:$0x75316420]
  %v244 = vld.sshfl [vmem:[#allocation1 + $0x10] sm:$0xff pattern:$0x75316420]
  %s245 = scalar_lea.vmem [#allocation1], 32
  %246 = vst [vmem:[%s245] ss:$2 sm:$0xff] %v34
  %s247 = scalar_lea.vmem [#allocation1], 48
  %248 = vst [vmem:[%s247] ss:$2 sm:$0xff] %v35
  %v249 = vld.sshfl [vmem:[#allocation1 + $0x20] sm:$0xff pattern:$0x75316420]
  %v250 = vld.sshfl [vmem:[#allocation1 + $0x28] sm:$0xff pattern:$0x75316420]
  %v251 = vld.sshfl [vmem:[#allocation1 + $0x30] sm:$0xff pattern:$0x75316420]
  %258 = vrot.lane.b32.xlu0 %v242, 96
  %v259 = vpop.permute.xlu0 %258
  %260 = vrot.lane.b32.xlu0 %v249, 96
  %v261 = vpop.permute.xlu0 %260
  %262 = vrot.lane.b32.xlu0 %v243, 96
  %v263 = vpop.permute.xlu0 %262
  %264 = vrot.lane.b32.xlu0 %v250, 96
  %v265 = vpop.permute.xlu0 %264
  %266 = vrot.lane.b32.xlu0 %v244, 96
  %v267 = vpop.permute.xlu0 %266
  %268 = vrot.lane.b32.xlu0 %v251, 96
  %v269 = vpop.permute.xlu0 %268
  %vm270 = vcmp.lt.s32.totalorder %v169, 96
  %v271 = vsel %vm270, %v263, %v267
  %v272 = vsel %vm270, %v265, %v269
  %v273 = vsel %vm270, %v259, %v263
  %v274 = vsel %vm270, %v261, %v265
  %v275 = vperm.slane %v273, 0
  %v276 = vperm.slane %v271, 0
  %v277 = vperm.slane %v274, 0
  %v278 = vperm.slane %v272, 0
  %279 = vset.pattern.permute.xlu0 24
  %280 = vperm.xlu0 %279, %v28
  %v281 = vpop.permute.xlu0 %280
  %v283 = vmul.f32 %v275, %v281
  %v284 = vmul.f32 %v276, %v281
  %v285 = vmul.f32 %v277, %v281
  %v286 = vmul.f32 %v278, %v281
  %v287 = vadd.f32 %v235, %v283
  %v288 = vadd.f32 %v236, %v284
  %v289 = vadd.f32 %v237, %v285
  %v290 = vadd.f32 %v238, %v286
  %v291 = vperm.slane %v273, 1
  %v292 = vperm.slane %v271, 1
  %v293 = vperm.slane %v274, 1
  %v294 = vperm.slane %v272, 1
  %295 = vset.pattern.permute.xlu0 25
  %296 = vperm.xlu0 %295, %v28
  %v297 = vpop.permute.xlu0 %296
  %v299 = vmul.f32 %v291, %v297
  %v300 = vmul.f32 %v292, %v297
  %v301 = vmul.f32 %v293, %v297
  %v302 = vmul.f32 %v294, %v297
  %v303 = vadd.f32 %v287, %v299
  %v304 = vadd.f32 %v288, %v300
  %v305 = vadd.f32 %v289, %v301
  %v306 = vadd.f32 %v290, %v302
  %v307 = vperm.slane %v273, 2
  %v308 = vperm.slane %v271, 2
  %v309 = vperm.slane %v274, 2
  %v310 = vperm.slane %v272, 2
  %311 = vset.pattern.permute.xlu0 26
  %312 = vperm.xlu0 %311, %v28
  %v313 = vpop.permute.xlu0 %312
  %v315 = vmul.f32 %v307, %v313
  %v316 = vmul.f32 %v308, %v313
  %v317 = vmul.f32 %v309, %v313
  %v318 = vmul.f32 %v310, %v313
  %v319 = vadd.f32 %v303, %v315
  %v320 = vadd.f32 %v304, %v316
  %v321 = vadd.f32 %v305, %v317
  %v322 = vadd.f32 %v306, %v318
  %v323 = vperm.slane %v273, 3
  %v324 = vperm.slane %v271, 3
  %v325 = vperm.slane %v274, 3
  %v326 = vperm.slane %v272, 3
  %327 = vset.pattern.permute.xlu0 27
  %328 = vperm.xlu0 %327, %v28
  %v329 = vpop.permute.xlu0 %328
  %v331 = vmul.f32 %v323, %v329
  %v332 = vmul.f32 %v324, %v329
  %v333 = vmul.f32 %v325, %v329
  %v334 = vmul.f32 %v326, %v329
  %v335 = vadd.f32 %v319, %v331
  %v336 = vadd.f32 %v320, %v332
  %v337 = vadd.f32 %v321, %v333
  %v338 = vadd.f32 %v322, %v334
  %v339 = vld [vmem:[%s5] ss:$4 sm:$0x3]
  %v341 = vperm.slane %v339, 0
  %v342 = vperm.slane %v339, 1
  %v345 = vmul.f32 %v335, %v341
  %v346 = vmul.f32 %v336, %v342
  %v347 = vmul.f32 %v337, %v341
  %v348 = vmul.f32 %v338, %v342
  %349 = vst [vmem:[#allocation1] ss:$2 sm:$0xff] %v32
  %s350 = scalar_lea.vmem [#allocation1], 16
  %351 = vst [vmem:[%s350] ss:$2 sm:$0xff] %v33
  %v352 = vld.sshfl [vmem:[#allocation1] sm:$0xff pattern:$0x75316420]
  %v353 = vld.sshfl [vmem:[#allocation1 + $0x8] sm:$0xff pattern:$0x75316420]
  %v354 = vld.sshfl [vmem:[#allocation1 + $0x10] sm:$0xff pattern:$0x75316420]
  %s355 = scalar_lea.vmem [#allocation1], 32
  %356 = vst [vmem:[%s355] ss:$2 sm:$0xff] %v34
  %s357 = scalar_lea.vmem [#allocation1], 48
  %358 = vst [vmem:[%s357] ss:$2 sm:$0xff] %v35
  %v359 = vld.sshfl [vmem:[#allocation1 + $0x20] sm:$0xff pattern:$0x75316420]
  %v360 = vld.sshfl [vmem:[#allocation1 + $0x28] sm:$0xff pattern:$0x75316420]
  %v361 = vld.sshfl [vmem:[#allocation1 + $0x30] sm:$0xff pattern:$0x75316420]
  %368 = vrot.lane.b32.xlu0 %v352, 127
  %v369 = vpop.permute.xlu0 %368
  %370 = vrot.lane.b32.xlu0 %v359, 127
  %v371 = vpop.permute.xlu0 %370
  %372 = vrot.lane.b32.xlu0 %v353, 127
  %v373 = vpop.permute.xlu0 %372
  %374 = vrot.lane.b32.xlu0 %v360, 127
  %v375 = vpop.permute.xlu0 %374
  %376 = vrot.lane.b32.xlu0 %v354, 127
  %v377 = vpop.permute.xlu0 %376
  %378 = vrot.lane.b32.xlu0 %v361, 127
  %v379 = vpop.permute.xlu0 %378
  %vm380 = vcmp.lt.s32.totalorder %v169, 127
  %v381 = vsel %vm380, %v373, %v377
  %v382 = vsel %vm380, %v375, %v379
  %v383 = vsel %vm380, %v369, %v373
  %v384 = vsel %vm380, %v371, %v375
  %v385 = vperm.slane %v383, 0
  %v386 = vperm.slane %v381, 0
  %v387 = vperm.slane %v384, 0
  %v388 = vperm.slane %v382, 0
  %389 = vset.pattern.permute.xlu0 4
  %390 = vperm.xlu0 %389, %v28
  %v391 = vpop.permute.xlu0 %390
  %v393 = vmul.f32 %v385, %v391
  %v394 = vmul.f32 %v386, %v391
  %v395 = vmul.f32 %v387, %v391
  %v396 = vmul.f32 %v388, %v391
  %v397 = vadd.f32 %v393, 0.0
  %v398 = vadd.f32 %v394, 0.0
  %v399 = vadd.f32 %v395, 0.0
  %v400 = vadd.f32 %v396, 0.0
  %v401 = vperm.slane %v383, 1
  %v402 = vperm.slane %v381, 1
  %v403 = vperm.slane %v384, 1
  %v404 = vperm.slane %v382, 1
  %405 = vset.pattern.permute.xlu0 5
  %406 = vperm.xlu0 %405, %v28
  %v407 = vpop.permute.xlu0 %406
  %v409 = vmul.f32 %v401, %v407
  %v410 = vmul.f32 %v402, %v407
  %v411 = vmul.f32 %v403, %v407
  %v412 = vmul.f32 %v404, %v407
  %v413 = vadd.f32 %v397, %v409
  %v414 = vadd.f32 %v398, %v410
  %v415 = vadd.f32 %v399, %v411
  %v416 = vadd.f32 %v400, %v412
  %v417 = vperm.slane %v383, 2
  %v418 = vperm.slane %v381, 2
  %v419 = vperm.slane %v384, 2
  %v420 = vperm.slane %v382, 2
  %421 = vset.pattern.permute.xlu0 6
  %422 = vperm.xlu0 %421, %v28
  %v423 = vpop.permute.xlu0 %422
  %v425 = vmul.f32 %v417, %v423
  %v426 = vmul.f32 %v418, %v423
  %v427 = vmul.f32 %v419, %v423
  %v428 = vmul.f32 %v420, %v423
  %v429 = vadd.f32 %v413, %v425
  %v430 = vadd.f32 %v414, %v426
  %v431 = vadd.f32 %v415, %v427
  %v432 = vadd.f32 %v416, %v428
  %v433 = vperm.slane %v383, 3
  %v434 = vperm.slane %v381, 3
  %v435 = vperm.slane %v384, 3
  %v436 = vperm.slane %v382, 3
  %437 = vset.pattern.permute.xlu0 7
  %438 = vperm.xlu0 %437, %v28
  %v439 = vpop.permute.xlu0 %438
  %v441 = vmul.f32 %v433, %v439
  %v442 = vmul.f32 %v434, %v439
  %v443 = vmul.f32 %v435, %v439
  %v444 = vmul.f32 %v436, %v439
  %v445 = vadd.f32 %v429, %v441
  %v446 = vadd.f32 %v430, %v442
  %v447 = vadd.f32 %v431, %v443
  %v448 = vadd.f32 %v432, %v444
  %449 = vst [vmem:[#allocation1] ss:$2 sm:$0xff] %v32
  %s450 = scalar_lea.vmem [#allocation1], 16
  %451 = vst [vmem:[%s450] ss:$2 sm:$0xff] %v33
  %v452 = vld.sshfl [vmem:[#allocation1] sm:$0xff pattern:$0x75316420]
  %v453 = vld.sshfl [vmem:[#allocation1 + $0x8] sm:$0xff pattern:$0x75316420]
  %v454 = vld.sshfl [vmem:[#allocation1 + $0x10] sm:$0xff pattern:$0x75316420]
  %s455 = scalar_lea.vmem [#allocation1], 32
  %456 = vst [vmem:[%s455] ss:$2 sm:$0xff] %v34
  %s457 = scalar_lea.vmem [#allocation1], 48
  %458 = vst [vmem:[%s457] ss:$2 sm:$0xff] %v35
  %v459 = vld.sshfl [vmem:[#allocation1 + $0x20] sm:$0xff pattern:$0x75316420]
  %v460 = vld.sshfl [vmem:[#allocation1 + $0x28] sm:$0xff pattern:$0x75316420]
  %v461 = vld.sshfl [vmem:[#allocation1 + $0x30] sm:$0xff pattern:$0x75316420]
  %468 = vrot.lane.b32.xlu0 %v452, 111
  %v469 = vpop.permute.xlu0 %468
  %470 = vrot.lane.b32.xlu0 %v459, 111
  %v471 = vpop.permute.xlu0 %470
  %472 = vrot.lane.b32.xlu0 %v453, 111
  %v473 = vpop.permute.xlu0 %472
  %474 = vrot.lane.b32.xlu0 %v460, 111
  %v475 = vpop.permute.xlu0 %474
  %476 = vrot.lane.b32.xlu0 %v454, 111
  %v477 = vpop.permute.xlu0 %476
  %478 = vrot.lane.b32.xlu0 %v461, 111
  %v479 = vpop.permute.xlu0 %478
  %vm480 = vcmp.lt.s32.totalorder %v169, 111
  %v481 = vsel %vm480, %v473, %v477
  %v482 = vsel %vm480, %v475, %v479
  %v483 = vsel %vm480, %v469, %v473
  %v484 = vsel %vm480, %v471, %v475
  %v485 = vperm.slane %v483, 0
  %v486 = vperm.slane %v481, 0
  %v487 = vperm.slane %v484, 0
  %v488 = vperm.slane %v482, 0
  %489 = vset.pattern.permute.xlu0 16
  %490 = vperm.xlu0 %489, %v28
  %v491 = vpop.permute.xlu0 %490
  %v493 = vmul.f32 %v485, %v491
  %v494 = vmul.f32 %v486, %v491
  %v495 = vmul.f32 %v487, %v491
  %v496 = vmul.f32 %v488, %v491
  %v497 = vadd.f32 %v445, %v493
  %v498 = vadd.f32 %v446, %v494
  %v499 = vadd.f32 %v447, %v495
  %v500 = vadd.f32 %v448, %v496
  %v501 = vperm.slane %v483, 1
  %v502 = vperm.slane %v481, 1
  %v503 = vperm.slane %v484, 1
  %v504 = vperm.slane %v482, 1
  %505 = vset.pattern.permute.xlu0 17
  %506 = vperm.xlu0 %505, %v28
  %v507 = vpop.permute.xlu0 %506
  %v509 = vmul.f32 %v501, %v507
  %v510 = vmul.f32 %v502, %v507
  %v511 = vmul.f32 %v503, %v507
  %v512 = vmul.f32 %v504, %v507
  %v513 = vadd.f32 %v497, %v509
  %v514 = vadd.f32 %v498, %v510
  %v515 = vadd.f32 %v499, %v511
  %v516 = vadd.f32 %v500, %v512
  %v517 = vperm.slane %v483, 2
  %v518 = vperm.slane %v481, 2
  %v519 = vperm.slane %v484, 2
  %v520 = vperm.slane %v482, 2
  %521 = vset.pattern.permute.xlu0 18
  %522 = vperm.xlu0 %521, %v28
  %v523 = vpop.permute.xlu0 %522
  %v525 = vmul.f32 %v517, %v523
  %v526 = vmul.f32 %v518, %v523
  %v527 = vmul.f32 %v519, %v523
  %v528 = vmul.f32 %v520, %v523
  %v529 = vadd.f32 %v513, %v525
  %v530 = vadd.f32 %v514, %v526
  %v531 = vadd.f32 %v515, %v527
  %v532 = vadd.f32 %v516, %v528
  %v533 = vperm.slane %v483, 3
  %v534 = vperm.slane %v481, 3
  %v535 = vperm.slane %v484, 3
  %v536 = vperm.slane %v482, 3
  %537 = vset.pattern.permute.xlu0 19
  %538 = vperm.xlu0 %537, %v28
  %v539 = vpop.permute.xlu0 %538
  %v541 = vmul.f32 %v533, %v539
  %v542 = vmul.f32 %v534, %v539
  %v543 = vmul.f32 %v535, %v539
  %v544 = vmul.f32 %v536, %v539
  %v545 = vadd.f32 %v529, %v541
  %v546 = vadd.f32 %v530, %v542
  %v547 = vadd.f32 %v531, %v543
  %v548 = vadd.f32 %v532, %v544
  %549 = vst [vmem:[#allocation1] ss:$2 sm:$0xff] %v32
  %s550 = scalar_lea.vmem [#allocation1], 16
  %551 = vst [vmem:[%s550] ss:$2 sm:$0xff] %v33
  %v552 = vld.sshfl [vmem:[#allocation1] sm:$0xff pattern:$0x75316420]
  %v553 = vld.sshfl [vmem:[#allocation1 + $0x8] sm:$0xff pattern:$0x75316420]
  %v554 = vld.sshfl [vmem:[#allocation1 + $0x10] sm:$0xff pattern:$0x75316420]
  %s555 = scalar_lea.vmem [#allocation1], 32
  %556 = vst [vmem:[%s555] ss:$2 sm:$0xff] %v34
  %s557 = scalar_lea.vmem [#allocation1], 48
  %558 = vst [vmem:[%s557] ss:$2 sm:$0xff] %v35
  %v559 = vld.sshfl [vmem:[#allocation1 + $0x20] sm:$0xff pattern:$0x75316420]
  %v560 = vld.sshfl [vmem:[#allocation1 + $0x28] sm:$0xff pattern:$0x75316420]
  %v561 = vld.sshfl [vmem:[#allocation1 + $0x30] sm:$0xff pattern:$0x75316420]
  %568 = vrot.lane.b32.xlu0 %v552, 95
  %v569 = vpop.permute.xlu0 %568
  %570 = vrot.lane.b32.xlu0 %v559, 95
  %v571 = vpop.permute.xlu0 %570
  %572 = vrot.lane.b32.xlu0 %v553, 95
  %v573 = vpop.permute.xlu0 %572
  %574 = vrot.lane.b32.xlu0 %v560, 95
  %v575 = vpop.permute.xlu0 %574
  %576 = vrot.lane.b32.xlu0 %v554, 95
  %v577 = vpop.permute.xlu0 %576
  %578 = vrot.lane.b32.xlu0 %v561, 95
  %v579 = vpop.permute.xlu0 %578
  %vm580 = vcmp.lt.s32.totalorder %v169, 95
  %v581 = vsel %vm580, %v573, %v577
  %v582 = vsel %vm580, %v575, %v579
  %v583 = vsel %vm580, %v569, %v573
  %v584 = vsel %vm580, %v571, %v575
  %v585 = vperm.slane %v583, 0
  %v586 = vperm.slane %v581, 0
  %v587 = vperm.slane %v584, 0
  %v588 = vperm.slane %v582, 0
  %589 = vset.pattern.permute.xlu0 28
  %590 = vperm.xlu0 %589, %v28
  %v591 = vpop.permute.xlu0 %590
  %v593 = vmul.f32 %v585, %v591
  %v594 = vmul.f32 %v586, %v591
  %v595 = vmul.f32 %v587, %v591
  %v596 = vmul.f32 %v588, %v591
  %v597 = vadd.f32 %v545, %v593
  %v598 = vadd.f32 %v546, %v594
  %v599 = vadd.f32 %v547, %v595
  %v600 = vadd.f32 %v548, %v596
  %v601 = vperm.slane %v583, 1
  %v602 = vperm.slane %v581, 1
  %v603 = vperm.slane %v584, 1
  %v604 = vperm.slane %v582, 1
  %605 = vset.pattern.permute.xlu0 29
  %606 = vperm.xlu0 %605, %v28
  %v607 = vpop.permute.xlu0 %606
  %v609 = vmul.f32 %v601, %v607
  %v610 = vmul.f32 %v602, %v607
  %v611 = vmul.f32 %v603, %v607
  %v612 = vmul.f32 %v604, %v607
  %v613 = vadd.f32 %v597, %v609
  %v614 = vadd.f32 %v598, %v610
  %v615 = vadd.f32 %v599, %v611
  %v616 = vadd.f32 %v600, %v612
  %v617 = vperm.slane %v583, 2
  %v618 = vperm.slane %v581, 2
  %v619 = vperm.slane %v584, 2
  %v620 = vperm.slane %v582, 2
  %621 = vset.pattern.permute.xlu0 30
  %622 = vperm.xlu0 %621, %v28
  %v623 = vpop.permute.xlu0 %622
  %v625 = vmul.f32 %v617, %v623
  %v626 = vmul.f32 %v618, %v623
  %v627 = vmul.f32 %v619, %v623
  %v628 = vmul.f32 %v620, %v623
  %v629 = vadd.f32 %v613, %v625
  %v630 = vadd.f32 %v614, %v626
  %v631 = vadd.f32 %v615, %v627
  %v632 = vadd.f32 %v616, %v628
  %v633 = vperm.slane %v583, 3
  %v634 = vperm.slane %v581, 3
  %v635 = vperm.slane %v584, 3
  %v636 = vperm.slane %v582, 3
  %637 = vset.pattern.permute.xlu0 31
  %638 = vperm.xlu0 %637, %v28
  %v639 = vpop.permute.xlu0 %638
  %v641 = vmul.f32 %v633, %v639
  %v642 = vmul.f32 %v634, %v639
  %v643 = vmul.f32 %v635, %v639
  %v644 = vmul.f32 %v636, %v639
  %v645 = vadd.f32 %v629, %v641
  %v646 = vadd.f32 %v630, %v642
  %v647 = vadd.f32 %v631, %v643
  %v648 = vadd.f32 %v632, %v644
  %649 = vst [vmem:[#allocation1] ss:$2 sm:$0xff] %v32
  %s650 = scalar_lea.vmem [#allocation1], 16
  %651 = vst [vmem:[%s650] ss:$2 sm:$0xff] %v33
  %v652 = vld.sshfl [vmem:[#allocation1] sm:$0xff pattern:$0x75316420]
  %v653 = vld.sshfl [vmem:[#allocation1 + $0x8] sm:$0xff pattern:$0x75316420]
  %v654 = vld.sshfl [vmem:[#allocation1 + $0x10] sm:$0xff pattern:$0x75316420]
  %s655 = scalar_lea.vmem [#allocation1], 32
  %656 = vst [vmem:[%s655] ss:$2 sm:$0xff] %v34
  %s657 = scalar_lea.vmem [#allocation1], 48
  %658 = vst [vmem:[%s657] ss:$2 sm:$0xff] %v35
  %v659 = vld.sshfl [vmem:[#allocation1 + $0x20] sm:$0xff pattern:$0x75316420]
  %v660 = vld.sshfl [vmem:[#allocation1 + $0x28] sm:$0xff pattern:$0x75316420]
  %v661 = vld.sshfl [vmem:[#allocation1 + $0x30] sm:$0xff pattern:$0x75316420]
  %668 = vrot.lane.b32.xlu0 %v652, 126
  %v669 = vpop.permute.xlu0 %668
  %670 = vrot.lane.b32.xlu0 %v659, 126
  %v671 = vpop.permute.xlu0 %670
  %672 = vrot.lane.b32.xlu0 %v653, 126
  %v673 = vpop.permute.xlu0 %672
  %674 = vrot.lane.b32.xlu0 %v660, 126
  %v675 = vpop.permute.xlu0 %674
  %676 = vrot.lane.b32.xlu0 %v654, 126
  %v677 = vpop.permute.xlu0 %676
  %678 = vrot.lane.b32.xlu0 %v661, 126
  %v679 = vpop.permute.xlu0 %678
  %vm680 = vcmp.lt.s32.totalorder %v169, 126
  %v681 = vsel %vm680, %v673, %v677
  %v682 = vsel %vm680, %v675, %v679
  %v683 = vsel %vm680, %v669, %v673
  %v684 = vsel %vm680, %v671, %v675
  %v685 = vperm.slane %v683, 0
  %v686 = vperm.slane %v681, 0
  %v687 = vperm.slane %v684, 0
  %v688 = vperm.slane %v682, 0
  %689 = vset.pattern.permute.xlu0 8
  %690 = vperm.xlu0 %689, %v28
  %v691 = vpop.permute.xlu0 %690
  %v693 = vmul.f32 %v685, %v691
  %v694 = vmul.f32 %v686, %v691
  %v695 = vmul.f32 %v687, %v691
  %v696 = vmul.f32 %v688, %v691
  %v697 = vadd.f32 %v693, 0.0
  %v698 = vadd.f32 %v694, 0.0
  %v699 = vadd.f32 %v695, 0.0
  %v700 = vadd.f32 %v696, 0.0
  %v701 = vperm.slane %v683, 1
  %v702 = vperm.slane %v681, 1
  %v703 = vperm.slane %v684, 1
  %v704 = vperm.slane %v682, 1
  %705 = vset.pattern.permute.xlu0 9
  %706 = vperm.xlu0 %705, %v28
  %v707 = vpop.permute.xlu0 %706
  %v709 = vmul.f32 %v701, %v707
  %v710 = vmul.f32 %v702, %v707
  %v711 = vmul.f32 %v703, %v707
  %v712 = vmul.f32 %v704, %v707
  %v713 = vadd.f32 %v697, %v709
  %v714 = vadd.f32 %v698, %v710
  %v715 = vadd.f32 %v699, %v711
  %v716 = vadd.f32 %v700, %v712
  %v717 = vperm.slane %v683, 2
  %v718 = vperm.slane %v681, 2
  %v719 = vperm.slane %v684, 2
  %v720 = vperm.slane %v682, 2
  %721 = vset.pattern.permute.xlu0 10
  %722 = vperm.xlu0 %721, %v28
  %v723 = vpop.permute.xlu0 %722
  %v725 = vmul.f32 %v717, %v723
  %v726 = vmul.f32 %v718, %v723
  %v727 = vmul.f32 %v719, %v723
  %v728 = vmul.f32 %v720, %v723
  %v729 = vadd.f32 %v713, %v725
  %v730 = vadd.f32 %v714, %v726
  %v731 = vadd.f32 %v715, %v727
  %v732 = vadd.f32 %v716, %v728
  %v733 = vperm.slane %v683, 3
  %v734 = vperm.slane %v681, 3
  %v735 = vperm.slane %v684, 3
  %v736 = vperm.slane %v682, 3
  %737 = vset.pattern.permute.xlu0 11
  %738 = vperm.xlu0 %737, %v28
  %v739 = vpop.permute.xlu0 %738
  %v741 = vmul.f32 %v733, %v739
  %v742 = vmul.f32 %v734, %v739
  %v743 = vmul.f32 %v735, %v739
  %v744 = vmul.f32 %v736, %v739
  %v745 = vadd.f32 %v729, %v741
  %v746 = vadd.f32 %v730, %v742
  %v747 = vadd.f32 %v731, %v743
  %v748 = vadd.f32 %v732, %v744
  %749 = vst [vmem:[#allocation1] ss:$2 sm:$0xff] %v32
  %s750 = scalar_lea.vmem [#allocation1], 16
  %751 = vst [vmem:[%s750] ss:$2 sm:$0xff] %v33
  %v752 = vld.sshfl [vmem:[#allocation1] sm:$0xff pattern:$0x75316420]
  %v753 = vld.sshfl [vmem:[#allocation1 + $0x8] sm:$0xff pattern:$0x75316420]
  %v754 = vld.sshfl [vmem:[#allocation1 + $0x10] sm:$0xff pattern:$0x75316420]
  %s755 = scalar_lea.vmem [#allocation1], 32
  %756 = vst [vmem:[%s755] ss:$2 sm:$0xff] %v34
  %s757 = scalar_lea.vmem [#allocation1], 48
  %758 = vst [vmem:[%s757] ss:$2 sm:$0xff] %v35
  %v759 = vld.sshfl [vmem:[#allocation1 + $0x20] sm:$0xff pattern:$0x75316420]
  %v760 = vld.sshfl [vmem:[#allocation1 + $0x28] sm:$0xff pattern:$0x75316420]
  %v761 = vld.sshfl [vmem:[#allocation1 + $0x30] sm:$0xff pattern:$0x75316420]
  %768 = vrot.lane.b32.xlu0 %v752, 110
  %v769 = vpop.permute.xlu0 %768
  %770 = vrot.lane.b32.xlu0 %v759, 110
  %v771 = vpop.permute.xlu0 %770
  %772 = vrot.lane.b32.xlu0 %v753, 110
  %v773 = vpop.permute.xlu0 %772
  %774 = vrot.lane.b32.xlu0 %v760, 110
  %v775 = vpop.permute.xlu0 %774
  %776 = vrot.lane.b32.xlu0 %v754, 110
  %v777 = vpop.permute.xlu0 %776
  %778 = vrot.lane.b32.xlu0 %v761, 110
  %v779 = vpop.permute.xlu0 %778
  %vm780 = vcmp.lt.s32.totalorder %v169, 110
  %v781 = vsel %vm780, %v773, %v777
  %v782 = vsel %vm780, %v775, %v779
  %v783 = vsel %vm780, %v769, %v773
  %v784 = vsel %vm780, %v771, %v775
  %v785 = vperm.slane %v783, 0
  %v786 = vperm.slane %v781, 0
  %v787 = vperm.slane %v784, 0
  %v788 = vperm.slane %v782, 0
  %789 = vset.pattern.permute.xlu0 20
  %790 = vperm.xlu0 %789, %v28
  %v791 = vpop.permute.xlu0 %790
  %v793 = vmul.f32 %v785, %v791
  %v794 = vmul.f32 %v786, %v791
  %v795 = vmul.f32 %v787, %v791
  %v796 = vmul.f32 %v788, %v791
  %v797 = vadd.f32 %v745, %v793
  %v798 = vadd.f32 %v746, %v794
  %v799 = vadd.f32 %v747, %v795
  %v800 = vadd.f32 %v748, %v796
  %v801 = vperm.slane %v783, 1
  %v802 = vperm.slane %v781, 1
  %v803 = vperm.slane %v784, 1
  %v804 = vperm.slane %v782, 1
  %805 = vset.pattern.permute.xlu0 21
  %806 = vperm.xlu0 %805, %v28
  %v807 = vpop.permute.xlu0 %806
  %v809 = vmul.f32 %v801, %v807
  %v810 = vmul.f32 %v802, %v807
  %v811 = vmul.f32 %v803, %v807
  %v812 = vmul.f32 %v804, %v807
  %v813 = vadd.f32 %v797, %v809
  %v814 = vadd.f32 %v798, %v810
  %v815 = vadd.f32 %v799, %v811
  %v816 = vadd.f32 %v800, %v812
  %v817 = vperm.slane %v783, 2
  %v818 = vperm.slane %v781, 2
  %v819 = vperm.slane %v784, 2
  %v820 = vperm.slane %v782, 2
  %821 = vset.pattern.permute.xlu0 22
  %822 = vperm.xlu0 %821, %v28
  %v823 = vpop.permute.xlu0 %822
  %v825 = vmul.f32 %v817, %v823
  %v826 = vmul.f32 %v818, %v823
  %v827 = vmul.f32 %v819, %v823
  %v828 = vmul.f32 %v820, %v823
  %v829 = vadd.f32 %v813, %v825
  %v830 = vadd.f32 %v814, %v826
  %v831 = vadd.f32 %v815, %v827
  %v832 = vadd.f32 %v816, %v828
  %v833 = vperm.slane %v783, 3
  %v834 = vperm.slane %v781, 3
  %v835 = vperm.slane %v784, 3
  %v836 = vperm.slane %v782, 3
  %837 = vset.pattern.permute.xlu0 23
  %838 = vperm.xlu0 %837, %v28
  %v839 = vpop.permute.xlu0 %838
  %v841 = vmul.f32 %v833, %v839
  %v842 = vmul.f32 %v834, %v839
  %v843 = vmul.f32 %v835, %v839
  %v844 = vmul.f32 %v836, %v839
  %v845 = vadd.f32 %v829, %v841
  %v846 = vadd.f32 %v830, %v842
  %v847 = vadd.f32 %v831, %v843
  %v848 = vadd.f32 %v832, %v844
  %849 = vst [vmem:[#allocation1] ss:$2 sm:$0xff] %v32
  %s850 = scalar_lea.vmem [#allocation1], 16
  %851 = vst [vmem:[%s850] ss:$2 sm:$0xff] %v33
  %v852 = vld.sshfl [vmem:[#allocation1] sm:$0xff pattern:$0x75316420]
  %v853 = vld.sshfl [vmem:[#allocation1 + $0x8] sm:$0xff pattern:$0x75316420]
  %v854 = vld.sshfl [vmem:[#allocation1 + $0x10] sm:$0xff pattern:$0x75316420]
  %s855 = scalar_lea.vmem [#allocation1], 32
  %856 = vst [vmem:[%s855] ss:$2 sm:$0xff] %v34
  %s857 = scalar_lea.vmem [#allocation1], 48
  %858 = vst [vmem:[%s857] ss:$2 sm:$0xff] %v35
  %v859 = vld.sshfl [vmem:[#allocation1 + $0x20] sm:$0xff pattern:$0x75316420]
  %v860 = vld.sshfl [vmem:[#allocation1 + $0x28] sm:$0xff pattern:$0x75316420]
  %v861 = vld.sshfl [vmem:[#allocation1 + $0x30] sm:$0xff pattern:$0x75316420]
  %868 = vrot.lane.b32.xlu0 %v852, 94
  %v869 = vpop.permute.xlu0 %868
  %870 = vrot.lane.b32.xlu0 %v859, 94
  %v871 = vpop.permute.xlu0 %870
  %872 = vrot.lane.b32.xlu0 %v853, 94
  %v873 = vpop.permute.xlu0 %872
  %874 = vrot.lane.b32.xlu0 %v860, 94
  %v875 = vpop.permute.xlu0 %874
  %876 = vrot.lane.b32.xlu0 %v854, 94
  %v877 = vpop.permute.xlu0 %876
  %878 = vrot.lane.b32.xlu0 %v861, 94
  %v879 = vpop.permute.xlu0 %878
  %vm880 = vcmp.lt.s32.totalorder %v169, 94
  %v881 = vsel %vm880, %v873, %v877
  %v882 = vsel %vm880, %v875, %v879
  %v883 = vsel %vm880, %v869, %v873
  %v884 = vsel %vm880, %v871, %v875
  %v885 = vperm.slane %v883, 0
  %v886 = vperm.slane %v881, 0
  %v887 = vperm.slane %v884, 0
  %v888 = vperm.slane %v882, 0
  %889 = vset.pattern.permute.xlu0 32
  %890 = vperm.xlu0 %889, %v28
  %v891 = vpop.permute.xlu0 %890
  %v893 = vmul.f32 %v885, %v891
  %v894 = vmul.f32 %v886, %v891
  %v895 = vmul.f32 %v887, %v891
  %v896 = vmul.f32 %v888, %v891
  %v897 = vadd.f32 %v845, %v893
  %v898 = vadd.f32 %v846, %v894
  %v899 = vadd.f32 %v847, %v895
  %v900 = vadd.f32 %v848, %v896
  %v901 = vperm.slane %v883, 1
  %v902 = vperm.slane %v881, 1
  %v903 = vperm.slane %v884, 1
  %v904 = vperm.slane %v882, 1
  %905 = vset.pattern.permute.xlu0 33
  %906 = vperm.xlu0 %905, %v28
  %v907 = vpop.permute.xlu0 %906
  %v909 = vmul.f32 %v901, %v907
  %v910 = vmul.f32 %v902, %v907
  %v911 = vmul.f32 %v903, %v907
  %v912 = vmul.f32 %v904, %v907
  %v913 = vadd.f32 %v897, %v909
  %v914 = vadd.f32 %v898, %v910
  %v915 = vadd.f32 %v899, %v911
  %v916 = vadd.f32 %v900, %v912
  %v917 = vperm.slane %v883, 2
  %v918 = vperm.slane %v881, 2
  %v919 = vperm.slane %v884, 2
  %v920 = vperm.slane %v882, 2
  %921 = vset.pattern.permute.xlu0 34
  %922 = vperm.xlu0 %921, %v28
  %v923 = vpop.permute.xlu0 %922
  %v925 = vmul.f32 %v917, %v923
  %v926 = vmul.f32 %v918, %v923
  %v927 = vmul.f32 %v919, %v923
  %v928 = vmul.f32 %v920, %v923
  %v929 = vadd.f32 %v913, %v925
  %v930 = vadd.f32 %v914, %v926
  %v931 = vadd.f32 %v915, %v927
  %v932 = vadd.f32 %v916, %v928
  %v933 = vperm.slane %v883, 3
  %v934 = vperm.slane %v881, 3
  %v935 = vperm.slane %v884, 3
  %v936 = vperm.slane %v882, 3
  %937 = vset.pattern.permute.xlu0 35
  %938 = vperm.xlu0 %937, %v28
  %v939 = vpop.permute.xlu0 %938
  %v941 = vmul.f32 %v933, %v939
  %v942 = vmul.f32 %v934, %v939
  %v943 = vmul.f32 %v935, %v939
  %v944 = vmul.f32 %v936, %v939
  %v945 = vadd.f32 %v929, %v941
  %v946 = vadd.f32 %v930, %v942
  %v947 = vadd.f32 %v931, %v943
  %v948 = vadd.f32 %v932, %v944
  %s949 = scalar_lea.vmem %s5, 2
  %v950 = vld [vmem:[%s949] ss:$4 sm:$0x3]
  %v952 = vperm.slane %v950, 0
  %v953 = vperm.slane %v950, 1
  %v956 = vmul.f32 %v945, %v952
  %v957 = vmul.f32 %v946, %v953
  %v958 = vmul.f32 %v947, %v952
  %v959 = vmul.f32 %v948, %v953
  %961 = vset.pattern.permute.xlu0 0
  %962 = vperm.xlu0 %961, %v29
  %v963 = vpop.permute.xlu0 %962
  %v965 = vadd.f32 %v963, %v345
  %v966 = vadd.f32 %v963, %v346
  %v967 = vadd.f32 %v963, %v347
  %v968 = vadd.f32 %v963, %v348
  %v969 = vadd.f32 %v965, %v645
  %v970 = vadd.f32 %v966, %v646
  %v971 = vadd.f32 %v967, %v647
  %v972 = vadd.f32 %v968, %v648
  %v973 = vadd.f32 %v969, %v956
  %v974 = vadd.f32 %v970, %v957
  %v975 = vadd.f32 %v971, %v958
  %v976 = vadd.f32 %v972, %v959
  %v977 = vadd.f32 %v973, %v974
  %978 = vadd.xlane.f32.xlu0 %v977
  %v979 = vpop.xlane.xlu0 %978
  %v980 = vadd.f32 %v975, %v976
  %981 = vadd.xlane.f32.xlu0 %v980
  %v982 = vpop.xlane.xlu0 %981
  %v983 = vadd.f32 %v979, %v982
  %v984 = vrcp.pop 512.0
  %v985 = vmul.f32 512.0, %v984
  %v986 = vsub.f32 1.0, %v985
  %v987 = vmul.f32 %v984, %v986
  %v988 = vadd.f32 %v984, %v987
  %vm989 = vweird.f32 %v984
  %v990 = vsel %vm989, %v984, %v988
  %v991 = vmul.f32 %v983, %v990
  %v992 = vsub.f32 %v973, %v991
  %v993 = vsub.f32 %v974, %v991
  %v994 = vsub.f32 %v975, %v991
  %v995 = vsub.f32 %v976, %v991
  %v996 = vmul.f32 %v992, %v992
  %v997 = vmul.f32 %v993, %v993
  %v998 = vmul.f32 %v994, %v994
  %v999 = vmul.f32 %v995, %v995
  %v1000 = vadd.f32 %v996, %v997
  %1001 = vadd.xlane.f32.xlu0 %v1000
  %v1002 = vpop.xlane.xlu0 %1001
  %v1003 = vadd.f32 %v998, %v999
  %1004 = vadd.xlane.f32.xlu0 %v1003
  %v1005 = vpop.xlane.xlu0 %1004
  %v1006 = vadd.f32 %v1002, %v1005
  %v1007 = vmul.f32 %v1006, %v990
  %v1008 = vadd.f32 %v1007, 1e-05
  %v1009 = vrsqrt.pop %v1008
  %v1010 = vmul.f32 %v1009, %v1008
  %v1011 = vmul.f32 %v1010, %v1009
  %v1012 = vmul.f32 0.5, %v1011
  %v1013 = vsub.f32 1.5, %v1012
  %v1014 = vmul.f32 %v1009, %v1013
  %vm1015 = vweird.f32 %v1008
  %vm1016 = vweird.f32 %v1009
  %vm1017 = vmor %vm1015, %vm1016
  %v1018 = vsel %vm1017, %v1009, %v1014
  %v1019 = vmul.f32 %v1018, %v30
  %1021 = vset.pattern.permute.xlu0 0
  %1022 = vperm.xlu0 %1021, %v1019
  %v1023 = vpop.permute.xlu0 %1022
  %v1025 = vmul.f32 %v992, %v1023
  %v1026 = vmul.f32 %v993, %v1023
  %v1027 = vmul.f32 %v994, %v1023
  %v1028 = vmul.f32 %v995, %v1023
  %1030 = vset.pattern.permute.xlu0 0
  %1031 = vperm.xlu0 %1030, %v31
  %v1032 = vpop.permute.xlu0 %1031
  %v1034 = vadd.f32 %v1025, %v1032
  %v1035 = vadd.f32 %v1026, %v1032
  %v1036 = vadd.f32 %v1027, %v1032
  %v1037 = vadd.f32 %v1028, %v1032
  %v1038 = vmax.f32 %v1034, 0.0
  %v1039 = vmax.f32 %v1035, 0.0
  %v1040 = vmax.f32 %v1036, 0.0
  %v1041 = vmax.f32 %v1037, 0.0
  %1042 = vst [vmem:[%s7] sm:$0xff] %v1038
  %1043 = vst [vmem:[%s7 + $0x8] sm:$0xff] %v1039
  %1044 = vst [vmem:[%s7 + $0x10] sm:$0xff] %v1040
  %1045 = vst [vmem:[%s7 + $0x18] sm:$0xff] %v1041
  %1046 = vrot.lane.b32.xlu0 %v1038, 127
  %v1047 = vpop.permute.xlu0 %1046
  %1048 = vrot.lane.b32.xlu0 %v1040, 127
  %v1049 = vpop.permute.xlu0 %1048
  %1050 = vrot.lane.b32.xlu0 %v1039, 127
  %v1051 = vpop.permute.xlu0 %1050
  %1052 = vrot.lane.b32.xlu0 %v1041, 127
  %v1053 = vpop.permute.xlu0 %1052
  %v1054 = vsel %vm380, %v1047, %v1051
  %v1055 = vsel %vm380, %v1049, %v1053
  %v1056 = vsel %vm380, %v1051, %v1047
  %v1057 = vsel %vm380, %v1053, %v1049
  %v1058 = vmax.f32 %v1038, %v1054
  %v1059 = vmax.f32 %v1039, %v1056
  %v1060 = vmax.f32 %v1040, %v1055
  %v1061 = vmax.f32 %v1041, %v1057
  %1062 = vrot.lane.b32.xlu0 %v1058, 112
  %v1063 = vpop.permute.xlu0 %1062
  %1064 = vrot.lane.b32.xlu0 %v1060, 112
  %v1065 = vpop.permute.xlu0 %1064
  %1066 = vrot.lane.b32.xlu0 %v1059, 112
  %v1067 = vpop.permute.xlu0 %1066
  %1068 = vrot.lane.b32.xlu0 %v1061, 112
  %v1069 = vpop.permute.xlu0 %1068
  %v1070 = vsel %vm170, %v1063, %v1067
  %v1071 = vsel %vm170, %v1065, %v1069
  %v1072 = vsel %vm170, %v1067, %v1063
  %v1073 = vsel %vm170, %v1069, %v1065
  %v1074 = vmax.f32 %v1058, %v1070
  %v1075 = vmax.f32 %v1059, %v1072
  %v1076 = vmax.f32 %v1060, %v1071
  %v1077 = vmax.f32 %v1061, %v1073
  %v1078 = vld [vmem:[%s6] sm:$0xff]
  %v1079 = vld [vmem:[%s6 + $0x8] sm:$0xff]
  %v1080 = vld [vmem:[%s6 + $0x10] sm:$0xff]
  %v1081 = vld [vmem:[%s6 + $0x18] sm:$0xff]
  %v1082 = vld [vmem:[%s6 + $0x20] sm:$0xff]
  %v1083 = vld [vmem:[%s6 + $0x28] sm:$0xff]
  %v1084 = vld [vmem:[%s6 + $0x30] sm:$0xff]
  %v1085 = vld [vmem:[%s6 + $0x38] sm:$0xff]
  %v1086 = vld [vmem:[%s6 + $0x40] sm:$0xff]
  %v1087 = vld [vmem:[%s6 + $0x48] sm:$0xff]
  %v1088 = vld [vmem:[%s6 + $0x50] sm:$0xff]
  %v1089 = vld [vmem:[%s6 + $0x58] sm:$0xff]
  %v1090 = vld [vmem:[%s6 + $0x60] sm:$0xff]
  %v1091 = vld [vmem:[%s6 + $0x68] sm:$0xff]
  %v1092 = vld [vmem:[%s6 + $0x70] sm:$0xff]
  %v1093 = vld [vmem:[%s6 + $0x78] sm:$0xff]
  %v1094 = vld [vmem:[%s6 + $0x80] sm:$0xff]
  %v1095 = vld [vmem:[%s6 + $0x88] sm:$0xff]
  %v1096 = vld [vmem:[%s6 + $0x90] sm:$0xff]
  %v1097 = vld [vmem:[%s6 + $0x98] sm:$0xff]
  %v1098 = vld [vmem:[%s6 + $0xa0] sm:$0xff]
  %v1099 = vld [vmem:[%s6 + $0xa8] sm:$0xff]
  %v1100 = vld [vmem:[%s6 + $0xb0] sm:$0xff]
  %v1101 = vld [vmem:[%s6 + $0xb8] sm:$0xff]
  %v1102 = vld [vmem:[%s6 + $0xc0] sm:$0xff]
  %v1103 = vld [vmem:[%s6 + $0xc8] sm:$0xff]
  %v1104 = vld [vmem:[%s6 + $0xd0] sm:$0xff]
  %v1105 = vld [vmem:[%s6 + $0xd8] sm:$0xff]
  %v1106 = vld [vmem:[%s6 + $0xe0] sm:$0xff]
  %v1107 = vld [vmem:[%s6 + $0xe8] sm:$0xff]
  %v1108 = vld [vmem:[%s6 + $0xf0] sm:$0xff]
  %v1109 = vld [vmem:[%s6 + $0xf8] sm:$0xff]
  %1110 = vmatpush.msra.mxu0 %v1093
  %1111 = vmatpush.msra.mxu0 %v1092
  %1112 = vmatpush.msra.mxu0 %v1091
  %1113 = vmatpush.msra.mxu0 %v1090
  %1114 = vmatpush.msra.mxu0 %v1089
  %1115 = vmatpush.msra.mxu0 %v1088
  %1116 = vmatpush.msra.mxu0 %v1087
  %1117 = vmatpush.msra.mxu0 %v1086
  %1118 = vmatpush.msra.mxu0 %v1085
  %1119 = vmatpush.msra.mxu0 %v1084
  %1120 = vmatpush.msra.mxu0 %v1083
  %1121 = vmatpush.msra.mxu0 %v1082
  %1122 = vmatpush.msra.mxu0 %v1081
  %1123 = vmatpush.msra.mxu0 %v1080
  %1124 = vmatpush.msra.mxu0 %v1079
  %1125 = vmatpush.msra.mxu0 %v1078
  %1126 = vmatmul.f32.gmra.mxu0 %v1074
  %v1127 = vpop.f32.mrf.mxu0
  %v1128 = vadd.f32 0.0, %v1127
  %1129 = vmatmul.f32.gmra.mxu0 %v1076
  %v1130 = vpop.f32.mrf.mxu0
  %v1131 = vadd.f32 0.0, %v1130
  %1132 = vdwg.mxu0
  %1133 = vmatpush.msra.mxu0 %v1109
  %1134 = vmatpush.msra.mxu0 %v1108
  %1135 = vmatpush.msra.mxu0 %v1107
  %1136 = vmatpush.msra.mxu0 %v1106
  %1137 = vmatpush.msra.mxu0 %v1105
  %1138 = vmatpush.msra.mxu0 %v1104
  %1139 = vmatpush.msra.mxu0 %v1103
  %1140 = vmatpush.msra.mxu0 %v1102
  %1141 = vmatpush.msra.mxu0 %v1101
  %1142 = vmatpush.msra.mxu0 %v1100
  %1143 = vmatpush.msra.mxu0 %v1099
  %1144 = vmatpush.msra.mxu0 %v1098
  %1145 = vmatpush.msra.mxu0 %v1097
  %1146 = vmatpush.msra.mxu0 %v1096
  %1147 = vmatpush.msra.mxu0 %v1095
  %1148 = vmatpush.msra.mxu0 %v1094
  %1149 = vmatmul.f32.gmra.mxu0 %v1075
  %v1150 = vpop.f32.mrf.mxu0
  %v1151 = vadd.f32 %v1128, %v1150
  %1152 = vmatmul.f32.gmra.mxu0 %v1077
  %v1153 = vpop.f32.mrf.mxu0
  %v1154 = vadd.f32 %v1131, %v1153
  %1155 = vdwg.mxu0
  %1157 = vrot.lane.b32.xlu0 %v1154, 64
  %v1158 = vpop.permute.xlu0 %1157
  %vm1160 = vcmask 523264
  %v1161 = vsel %vm1160, %v1151, %v1158
  %1162 = vst [vmem:[%s8] sm:$0xff] %v1161
  // Predicated region
  $region30: #{encoder_block_forward.1} parent=0 // pred_check
    _
  $region31: #{encoder_block_forward.1} parent=0 // pred_check_branch
    %1164 = sbr.rel (0) target = $region33
  $region32: #{encoder_block_forward.1} parent=0 // pred_region
    _
  $region33: #{encoder_block_forward.1} parent=0 // pred_fallthru
    _
  // Predicated region
  $region34: #{encoder_block_forward.1} parent=0 // pred_check
    _
  $region35: #{encoder_block_forward.1} parent=0 // pred_check_branch
    %1166 = sbr.rel (0) target = $region37
  $region36: #{encoder_block_forward.1} parent=0 // pred_region
    _
  $region37: #{encoder_block_forward.1} parent=0 // pred_fallthru
    _
  // Predicated region
  $region38: #{encoder_block_forward.1} parent=0 // pred_check
    _
  $region39: #{encoder_block_forward.1} parent=0 // pred_check_branch
    %1168 = sbr.rel (0) target = $region41
  $region40: #{encoder_block_forward.1} parent=0 // pred_region
    _
  $region41: #{encoder_block_forward.1} parent=0 // pred_fallthru
    _
  // Predicated region
  $region42: #{encoder_block_forward.1} parent=0 // pred_check
    _
  $region43: #{encoder_block_forward.1} parent=0 // pred_check_branch
    %1170 = sbr.rel (0) target = $region45
  $region44: #{encoder_block_forward.1} parent=0 // pred_region
    _
  $region45: #{encoder_block_forward.1} parent=0 // pred_fallthru
    _

</llo_original>
